<compile_context>
chip_gen: v6e
topology: v6e:2x2x1
jax: 0.10.0
libtpu: 0.0.40
codegen_flags: <defaults>
</compile_context>

<pallas_src>
import jax
import jax.numpy as jnp
from jax.experimental import pallas as pl
from jax.experimental.pallas import tpu as pltpu


def _round_up(x, m):
    return (x + m - 1) // m * m


def _choose_tile_b(batch, max_tile_b=1024):
    """Largest multiple-of-128 batch tile that minimizes padded rows.

    Also capped so that large batches produce >= 2 grid steps (v7x megacore
    sharding of the 'parallel' axis) and tiles never exceed max_tile_b.
    """
    b128 = _round_up(batch, 128)
    cap = min(max_tile_b, b128)
    if b128 >= 256:  # enough rows for two tiles -> let both v7x TCs run
        cap = min(cap, _round_up(pl.cdiv(batch, 2), 128))
    best_t, best_pad = 128, _round_up(batch, 128)
    t = 128
    while t <= cap:
        pad = _round_up(batch, t)
        if pad < best_pad or (pad == best_pad and t > best_t):
            best_t, best_pad = t, pad
        t += 128
    return best_t


def qnetwork_kernel(x_ref, w1_ref, b1_ref, w2_ref, b2_ref, w3_ref, b3_ref,
                    out_ref):
    """One batch tile: fused 3-layer MLP, bf16 MXU inputs, f32 accumulation."""
    # Layer 1: single K = S+A dot against the unsplit W1.
    h1 = jnp.dot(x_ref[...].astype(jnp.bfloat16), w1_ref[...],
                 preferred_element_type=jnp.float32)
    h1 = jnp.maximum(h1 + b1_ref[...], 0.0)          # bias + ReLU in f32 (VPU)

    # Layer 2.
    h2 = jnp.dot(h1.astype(jnp.bfloat16), w2_ref[...],
                 preferred_element_type=jnp.float32)
    h2 = jnp.maximum(h2 + b2_ref[...], 0.0)

    # Layer 3: W3 stored pre-transposed as (H, 1) so no XLU transpose of h2.
    q = jnp.dot(h2.astype(jnp.bfloat16), w3_ref[...],
                preferred_element_type=jnp.float32)   # (tile_b, 1)
    out_ref[...] = q + b3_ref[0, 0]


def qnetwork_forward(state, action, params, *, max_tile_b=1024):
    """Pallas forward. state: (B, S), action: (B, A) -> (B, 1) f32."""
    w1, b1, w2, b2, w3t, b3 = params
    B, S = state.shape
    A = action.shape[1]
    in_dim = S + A
    H = w2.shape[0]
    assert w1.shape == (in_dim, H) and w3t.shape == (H, 1)

    # Concat fused into the wrapper (tiny: B * (S+A) elements).
    x = jnp.concatenate([state, action], axis=1)

    tile_b = _choose_tile_b(B, max_tile_b)
    b_pad = _round_up(B, tile_b)
    num_tiles = b_pad // tile_b
    if b_pad != B:
        x = jnp.pad(x, ((0, b_pad - B), (0, 0)))

    flops = 2 * b_pad * (in_dim * H + H * H + H)
    bytes_accessed = (
        b_pad * in_dim * x.dtype.itemsize         # input tiles
        + (in_dim * H + H * H + H) * 2            # bf16 weights
        + (2 * H + 1) * 4                         # f32 biases
        + b_pad * 4                               # f32 output
    )

    out = pl.pallas_call(
        qnetwork_kernel,
        grid=(num_tiles,),
        in_specs=[
            pl.BlockSpec((tile_b, in_dim), lambda i: (i, 0)),   # x tile
            pl.BlockSpec((in_dim, H), lambda i: (0, 0)),        # W1 (resident)
            pl.BlockSpec((1, H), lambda i: (0, 0)),             # b1
            pl.BlockSpec((H, H), lambda i: (0, 0)),             # W2 (resident)
            pl.BlockSpec((1, H), lambda i: (0, 0)),             # b2
            pl.BlockSpec((H, 1), lambda i: (0, 0)),             # W3^T (resident)
            pl.BlockSpec(memory_space=pltpu.MemorySpace.SMEM),  # b3 scalar
        ],
        out_specs=pl.BlockSpec((tile_b, 1), lambda i: (i, 0)),
        out_shape=jax.ShapeDtypeStruct((b_pad, 1), jnp.float32),
        compiler_params=pltpu.CompilerParams(
            dimension_semantics=("parallel",),
            vmem_limit_bytes=32 * 1024 * 1024),
        cost_estimate=pl.CostEstimate(
            flops=flops, transcendentals=0, bytes_accessed=bytes_accessed),
    )(x, w1, b1, w2, b2, w3t, b3)

    return out[:B]


def init_params(key, state_dim, action_dim, hidden_dim, init_w=0.003):
    """nn.Linear-shaped params, stored (in, out); weights bf16, biases f32.

    W3 is stored pre-transposed as (H, 1) so the kernel's last dot needs no
    transpose. Numerics: bf16 weights + bf16-cast activations with f32
    accumulation — will not bit-match an all-f32 PyTorch QNetwork (fine for an
    RL critic; the reference below matches by construction).
    """
    input_dim = state_dim + action_dim
    k1, k2, k3, k4, k5, k6 = jax.random.split(key, 6)

    def uniform_fan_in(k, shape, fan_in):
        bound = float(fan_in) ** -0.5
        return jax.random.uniform(k, shape, jnp.float32, -bound, bound)

    w1 = uniform_fan_in(k1, (input_dim, hidden_dim), input_dim)
    b1 = uniform_fan_in(k2, (1, hidden_dim), input_dim)
    w2 = uniform_fan_in(k3, (hidden_dim, hidden_dim), hidden_dim)
    b2 = uniform_fan_in(k4, (1, hidden_dim), hidden_dim)
    w3t = jax.random.uniform(k5, (hidden_dim, 1), jnp.float32, -init_w, init_w)
    b3 = jax.random.uniform(k6, (1, 1), jnp.float32, -init_w, init_w)

    return (w1.astype(jnp.bfloat16), b1,
            w2.astype(jnp.bfloat16), b2,
            w3t.astype(jnp.bfloat16), b3)


def reference_forward(state, action, params):
    """Pure-JAX reference with the same bf16-weight / f32-accumulate numerics."""
    w1, b1, w2, b2, w3t, b3 = params
    x = jnp.concatenate([state, action], axis=1)
    h1 = jnp.dot(x.astype(jnp.bfloat16), w1,
                 preferred_element_type=jnp.float32) + b1
    h1 = jnp.maximum(h1, 0.0)
    h2 = jnp.dot(h1.astype(jnp.bfloat16), w2,
                 preferred_element_type=jnp.float32) + b2
    h2 = jnp.maximum(h2, 0.0)
    return jnp.dot(h2.astype(jnp.bfloat16), w3t,
                   preferred_element_type=jnp.float32) + b3


if __name__ == "__main__":
    # Small shapes consistent with the module (hidden_dim = 512 as in ac.py).
    batch = 8
    state_dim = 24
    action_dim = 8
    hidden_dim = 512

    key = jax.random.PRNGKey(0)
    k_state, k_action, k_params = jax.random.split(key, 3)

    state = jax.random.normal(k_state, (batch, state_dim), jnp.float32)
    action = jax.random.normal(k_action, (batch, action_dim), jnp.float32)
    params = init_params(k_params, state_dim, action_dim, hidden_dim)

    out = qnetwork_forward(state, action, params)
    out = jax.block_until_ready(out)

    ref = reference_forward(state, action, params)
    assert out.shape == (batch, 1), out.shape
    assert jnp.allclose(out, ref, atol=5e-4, rtol=1e-3), (
        "mismatch vs reference", float(jnp.max(jnp.abs(out - ref))))

    print("KERNEL_OK")
</pallas_src>

<mosaic_0001>
module attributes {stable_mosaic.version = 11 : i64} {
  func.func @qnetwork_kernel(%arg0: i32, %arg1: memref<128x32xf32, #tpu.memory_space<vmem>>, %arg2: memref<32x512xbf16, #tpu.memory_space<vmem>>, %arg3: memref<1x512xf32, #tpu.memory_space<vmem>>, %arg4: memref<512x512xbf16, #tpu.memory_space<vmem>>, %arg5: memref<1x512xf32, #tpu.memory_space<vmem>>, %arg6: memref<512x1xbf16, #tpu.memory_space<vmem>>, %arg7: memref<1x1xf32, #tpu.memory_space<smem>>, %arg8: memref<128x1xf32, #tpu.memory_space<vmem>>) attributes {dimension_semantics = [#tpu.dimension_semantics<parallel>], iteration_bounds = array<i64: 1>, scalar_prefetch = 0 : i64, scratch_operands = 0 : i64, tpu.core_type = #tpu.core_type<tc>, window_params = [{transform_indices = @transform_0, window_bounds = array<i64: 128, 32>}, {pipeline_mode = #tpu.pipeline_mode<synchronous>, transform_indices = @transform_1, window_bounds = array<i64: 32, 512>}, {pipeline_mode = #tpu.pipeline_mode<synchronous>, transform_indices = @transform_2, window_bounds = array<i64: 1, 512>}, {pipeline_mode = #tpu.pipeline_mode<synchronous>, transform_indices = @transform_3, window_bounds = array<i64: 512, 512>}, {pipeline_mode = #tpu.pipeline_mode<synchronous>, transform_indices = @transform_4, window_bounds = array<i64: 1, 512>}, {pipeline_mode = #tpu.pipeline_mode<synchronous>, transform_indices = @transform_5, window_bounds = array<i64: 512, 1>}, {transform_indices = @transform_6, window_bounds = array<i64: 1, 1>}, {transform_indices = @transform_7, window_bounds = array<i64: 128, 1>}]} {
    %c0 = arith.constant 0 : index
    %c0_0 = arith.constant 0 : index
    %0 = vector.load %arg1[%c0, %c0_0] : memref<128x32xf32, #tpu.memory_space<vmem>>, vector<128x32xf32>
    %1 = arith.truncf %0 : vector<128x32xf32> to vector<128x32xbf16>
    %c0_1 = arith.constant 0 : index
    %c0_2 = arith.constant 0 : index
    %2 = vector.load %arg2[%c0_1, %c0_2] : memref<32x512xbf16, #tpu.memory_space<vmem>>, vector<32x512xbf16>
    %cst = arith.constant dense<0.000000e+00> : vector<128x512xf32>
    %3 = tpu.matmul %1, %2, %cst {dimension_numbers = #tpu.dot_dimension_numbers<[1], [0], [0], [1], [0, 0, 1, 1], [], []>} : vector<128x32xbf16>, vector<32x512xbf16>, vector<128x512xf32> -> vector<128x512xf32>
    %c0_3 = arith.constant 0 : index
    %c0_4 = arith.constant 0 : index
    %4 = vector.load %arg3[%c0_3, %c0_4] : memref<1x512xf32, #tpu.memory_space<vmem>>, vector<1x512xf32>
    %5 = vector.broadcast %4 : vector<1x512xf32> to vector<128x512xf32>
    %6 = arith.addf %3, %5 : vector<128x512xf32>
    %cst_5 = arith.constant 0.000000e+00 : f32
    %7 = vector.broadcast %cst_5 : f32 to vector<128x512xf32>
    %8 = arith.maximumf %6, %7 : vector<128x512xf32>
    %9 = arith.truncf %8 : vector<128x512xf32> to vector<128x512xbf16>
    %c0_6 = arith.constant 0 : index
    %c0_7 = arith.constant 0 : index
    %10 = vector.load %arg4[%c0_6, %c0_7] : memref<512x512xbf16, #tpu.memory_space<vmem>>, vector<512x512xbf16>
    %cst_8 = arith.constant dense<0.000000e+00> : vector<128x512xf32>
    %11 = tpu.matmul %9, %10, %cst_8 {dimension_numbers = #tpu.dot_dimension_numbers<[1], [0], [0], [1], [0, 0, 1, 1], [], []>} : vector<128x512xbf16>, vector<512x512xbf16>, vector<128x512xf32> -> vector<128x512xf32>
    %c0_9 = arith.constant 0 : index
    %c0_10 = arith.constant 0 : index
    %12 = vector.load %arg5[%c0_9, %c0_10] : memref<1x512xf32, #tpu.memory_space<vmem>>, vector<1x512xf32>
    %13 = vector.broadcast %12 : vector<1x512xf32> to vector<128x512xf32>
    %14 = arith.addf %11, %13 : vector<128x512xf32>
    %cst_11 = arith.constant 0.000000e+00 : f32
    %15 = vector.broadcast %cst_11 : f32 to vector<128x512xf32>
    %16 = arith.maximumf %14, %15 : vector<128x512xf32>
    %17 = arith.truncf %16 : vector<128x512xf32> to vector<128x512xbf16>
    %c0_12 = arith.constant 0 : index
    %c0_13 = arith.constant 0 : index
    %18 = vector.load %arg6[%c0_12, %c0_13] : memref<512x1xbf16, #tpu.memory_space<vmem>>, vector<512x1xbf16>
    %cst_14 = arith.constant dense<0.000000e+00> : vector<128x1xf32>
    %19 = tpu.matmul %17, %18, %cst_14 {dimension_numbers = #tpu.dot_dimension_numbers<[1], [0], [0], [1], [0, 0, 1, 1], [], []>} : vector<128x512xbf16>, vector<512x1xbf16>, vector<128x1xf32> -> vector<128x1xf32>
    %c0_15 = arith.constant 0 : index
    %c0_16 = arith.constant 0 : index
    %20 = memref.load %arg7[%c0_15, %c0_16] : memref<1x1xf32, #tpu.memory_space<smem>>
    %21 = vector.broadcast %20 : f32 to vector<128x1xf32>
    %22 = arith.addf %19, %21 : vector<128x1xf32>
    %c0_17 = arith.constant 0 : index
    %c0_18 = arith.constant 0 : index
    %23 = vector.load %arg8[%c0_17, %c0_18] : memref<128x1xf32, #tpu.memory_space<vmem>>, vector<128x1xf32>
    tpu.vector_store %arg8[%c0_17, %c0_18], %22 {strides = array<i32>} : memref<128x1xf32, #tpu.memory_space<vmem>>, vector<128x1xf32>,
    return
  }
  func.func @transform_0(%arg0: i32) -> (i32, i32) {
    %c0_i32 = arith.constant 0 : i32
    %c0_i32_0 = arith.constant 0 : i32
    return %arg0, %c0_i32 : i32, i32
  }
  func.func @transform_1(%arg0: i32) -> (i32, i32) {
    %c0_i32 = arith.constant 0 : i32
    %c0_i32_0 = arith.constant 0 : i32
    %c0_i32_1 = arith.constant 0 : i32
    return %c0_i32, %c0_i32_0 : i32, i32
  }
  func.func @transform_2(%arg0: i32) -> (i32, i32) {
    %c0_i32 = arith.constant 0 : i32
    %c0_i32_0 = arith.constant 0 : i32
    %c0_i32_1 = arith.constant 0 : i32
    return %c0_i32, %c0_i32_0 : i32, i32
  }
  func.func @transform_3(%arg0: i32) -> (i32, i32) {
    %c0_i32 = arith.constant 0 : i32
    %c0_i32_0 = arith.constant 0 : i32
    %c0_i32_1 = arith.constant 0 : i32
    return %c0_i32, %c0_i32_0 : i32, i32
  }
  func.func @transform_4(%arg0: i32) -> (i32, i32) {
    %c0_i32 = arith.constant 0 : i32
    %c0_i32_0 = arith.constant 0 : i32
    %c0_i32_1 = arith.constant 0 : i32
    return %c0_i32, %c0_i32_0 : i32, i32
  }
  func.func @transform_5(%arg0: i32) -> (i32, i32) {
    %c0_i32 = arith.constant 0 : i32
    %c0_i32_0 = arith.constant 0 : i32
    %c0_i32_1 = arith.constant 0 : i32
    return %c0_i32, %c0_i32_0 : i32, i32
  }
  func.func @transform_6(%arg0: i32) -> (i32, i32) {
    %c0_i32 = arith.constant 0 : i32
    %c0_i32_0 = arith.constant 0 : i32
    %c0_i32_1 = arith.constant 0 : i32
    return %c0_i32, %c0_i32_0 : i32, i32
  }
  func.func @transform_7(%arg0: i32) -> (i32, i32) {
    %c0_i32 = arith.constant 0 : i32
    %c0_i32_0 = arith.constant 0 : i32
    return %arg0, %c0_i32 : i32, i32
  }
}

</mosaic_0001>

<llo_original>
// kernel: tpu_custom_call.1
$region0: #{tpu_custom_call.1}
  #allocation0 [shape = 'u32[]', space=smem, size = 0x4, offset = 0x4, fixed_abs, tag = 'smem constant byte address 0x4 - core index']
  #allocation1 [shape = 'u32[144,128]{1,0:T(1,128)}', space=vmem, size = 0x12000, scoped, tag = 'internal scratch']
  #allocation2 [shape = 'f32[1,1]{1,0:T(1,128)S(6)}', space=smem, size = 0x200, scoped, tag = 'scoped memory for tpu_custom_call.1']
  %s0 = inlined_call_operand.vmem [shape: f32[128,32], index: 0, kind: input, shape index: {}]
  %s1 = inlined_call_operand.vmem [shape: bf16[32,512], index: 1, kind: input, shape index: {}]
  %s2 = inlined_call_operand.vmem [shape: f32[1,512], index: 2, kind: input, shape index: {}]
  %s3 = inlined_call_operand.hbm [shape: bf16[512,512], index: 3, kind: input, shape index: {}]
  %s4 = inlined_call_operand.vmem [shape: f32[1,512], index: 4, kind: input, shape index: {}]
  %s5 = inlined_call_operand.vmem [shape: bf16[512,1], index: 5, kind: input, shape index: {}]
  %s6 = inlined_call_operand.<no memory space> [shape: f32[1,1], index: 6, kind: input, shape index: {}]
  %s7 = inlined_call_operand.vmem [shape: f32[128,1], index: 7, kind: output, shape index: {}]
  %s8 = sld [smem:[#allocation0]]
  $region42: #{tpu_custom_call.1} parent=0
    _
  %s10 = ssub.s32 1, %s8
  %s11 = scalar_select 0, %s10, %s8
  %12 = sst [smem:[#allocation2]] %s6
  $region1: #{tpu_custom_call.1} parent=0
    #allocation3 [shape = 'u8[524288]{0}', space=vmem, size = 0x80000, scoped, tag = 'input window, operand 3, single buffered']
    #allocation4 [shape = 's32[1]{0}', space=sflag, size = 0x4, scoped, tag = 'scoped memory for tpu_custom_call.1']
    %13 = vsyncpa [#allocation4], 0
    // Predicated region
    $region2: #{tpu_custom_call.1} parent=1 // pred_check
      _
    $region3: #{tpu_custom_call.1} parent=1 // pred_check_branch
      %15 = sbr.rel (0) target = $region5
    $region4: #{tpu_custom_call.1} parent=1 // pred_region
      _
    $region5: #{tpu_custom_call.1} parent=1 // pred_fallthru
      _
    // Predicated region
    $region6: #{tpu_custom_call.1} parent=1 // pred_check
      _
    $region7: #{tpu_custom_call.1} parent=1 // pred_check_branch
      %17 = sbr.rel (0) target = $region9
    $region8: #{tpu_custom_call.1} parent=1 // pred_region
      _
    $region9: #{tpu_custom_call.1} parent=1 // pred_fallthru
      _
    // Predicated region
    $region10: #{tpu_custom_call.1} parent=1 // pred_check
      _
    $region11: #{tpu_custom_call.1} parent=1 // pred_check_branch
      %19 = sbr.rel (0) target = $region13
    $region12: #{tpu_custom_call.1} parent=1 // pred_region
      _
    $region13: #{tpu_custom_call.1} parent=1 // pred_fallthru
      _
    // Predicated region
    $region14: #{tpu_custom_call.1} parent=1 // pred_check
      _
    $region15: #{tpu_custom_call.1} parent=1 // pred_check_branch
      %21 = sbr.rel (0) target = $region17
    $region16: #{tpu_custom_call.1} parent=1 // pred_region
      %s23 = ssub.s32 16384, 16384
      %24 = vsyncadd [#allocation4], %s23
      %s25 = sshll.u32 [#allocation3], 4
      %s26 = int_to_ptr.vmem [resolvable:$true] %s25
      %31 = dma.hbm_to_vmem [thread:$0]  %s3, 16384, %s26, [#allocation4], 256, 256, 16
    $region17: #{tpu_custom_call.1} parent=1 // pred_fallthru
      _
    // Predicated region
    $region18: #{tpu_custom_call.1} parent=1 // pred_check
      _
    $region19: #{tpu_custom_call.1} parent=1 // pred_check_branch
      %33 = sbr.rel (0) target = $region21
    $region20: #{tpu_custom_call.1} parent=1 // pred_region
      _
    $region21: #{tpu_custom_call.1} parent=1 // pred_fallthru
      _
    // Predicated region
    $region22: #{tpu_custom_call.1} parent=1 // pred_check
      _
    $region23: #{tpu_custom_call.1} parent=1 // pred_check_branch
      %35 = sbr.rel (0) target = $region25
    $region24: #{tpu_custom_call.1} parent=1 // pred_region
      _
    $region25: #{tpu_custom_call.1} parent=1 // pred_fallthru
      _
    // Predicated region
    $region26: #{tpu_custom_call.1} parent=1 // pred_check
      _
    $region27: #{tpu_custom_call.1} parent=1 // pred_check_branch
      %37 = sbr.rel (0) target = $region29
    $region28: #{tpu_custom_call.1} parent=1 // pred_region
      _
    $region29: #{tpu_custom_call.1} parent=1 // pred_fallthru
      _
    // Predicated region
    $region30: #{tpu_custom_call.1} parent=1 // pred_check
      _
    $region31: #{tpu_custom_call.1} parent=1 // pred_check_branch
      %39 = sbr.rel (0) target = $region33
    $region32: #{tpu_custom_call.1} parent=1 // pred_region
      %40 = dma.done [#allocation4], 16384
    $region33: #{tpu_custom_call.1} parent=1 // pred_fallthru
      _
    %v42 = vld [vmem:[%s0] sm:$0xff]
    %v43 = vld [vmem:[%s0 + $0x8] sm:$0xff]
    %v44 = vld [vmem:[%s0 + $0x10] sm:$0xff]
    %v45 = vld [vmem:[%s0 + $0x18] sm:$0xff]
    %v46 = vld [vmem:[%s0 + $0x20] sm:$0xff]
    %v47 = vld [vmem:[%s0 + $0x28] sm:$0xff]
    %v48 = vld [vmem:[%s0 + $0x30] sm:$0xff]
    %v49 = vld [vmem:[%s0 + $0x38] sm:$0xff]
    %v50 = vld [vmem:[%s0 + $0x40] sm:$0xff]
    %v51 = vld [vmem:[%s0 + $0x48] sm:$0xff]
    %v52 = vld [vmem:[%s0 + $0x50] sm:$0xff]
    %v53 = vld [vmem:[%s0 + $0x58] sm:$0xff]
    %v54 = vld [vmem:[%s0 + $0x60] sm:$0xff]
    %v55 = vld [vmem:[%s0 + $0x68] sm:$0xff]
    %v56 = vld [vmem:[%s0 + $0x70] sm:$0xff]
    %v57 = vld [vmem:[%s0 + $0x78] sm:$0xff]
    %v58 = vpack.c.bf16 %v43, %v42
    %v59 = vpack.c.bf16 %v45, %v44
    %v60 = vpack.c.bf16 %v47, %v46
    %v61 = vpack.c.bf16 %v49, %v48
    %v62 = vpack.c.bf16 %v51, %v50
    %v63 = vpack.c.bf16 %v53, %v52
    %v64 = vpack.c.bf16 %v55, %v54
    %v65 = vpack.c.bf16 %v57, %v56
    %v66 = vld [vmem:[%s1] sm:$0xff]
    %v67 = vld [vmem:[%s1 + $0x8] sm:$0xff]
    %v68 = vld [vmem:[%s1 + $0x10] sm:$0xff]
    %v69 = vld [vmem:[%s1 + $0x18] sm:$0xff]
    %v70 = vld [vmem:[%s1 + $0x20] sm:$0xff]
    %v71 = vld [vmem:[%s1 + $0x28] sm:$0xff]
    %v72 = vld [vmem:[%s1 + $0x30] sm:$0xff]
    %v73 = vld [vmem:[%s1 + $0x38] sm:$0xff]
    %v74 = vld [vmem:[%s2] sm:$0xf]
    %v76 = vlaneseq
    %v77 = vshrl.u32 %v76, 7
    %v78 = vsub.s32 0, %v77
    %v79 = vrot.slane %v74, %v78
    %v80 = vlaneseq
    %v81 = vshrl.u32 %v80, 7
    %v82 = vsub.s32 1, %v81
    %v83 = vrot.slane %v74, %v82
    %v84 = vlaneseq
    %v85 = vshrl.u32 %v84, 7
    %v86 = vsub.s32 2, %v85
    %v87 = vrot.slane %v74, %v86
    %v88 = vlaneseq
    %v89 = vshrl.u32 %v88, 7
    %v90 = vsub.s32 3, %v89
    %v91 = vrot.slane %v74, %v90
    %v104 = vunpack.c.l.b16 %v66
    %v105 = vunpack.c.h.b16 %v66
    %v106 = vunpack.c.l.b16 %v67
    %v107 = vunpack.c.h.b16 %v67
    %v108 = vunpack.c.l.b16 %v68
    %v109 = vunpack.c.h.b16 %v68
    %v110 = vunpack.c.l.b16 %v69
    %v111 = vunpack.c.h.b16 %v69
    %v112 = vunpack.c.l.b16 %v70
    %v113 = vunpack.c.h.b16 %v70
    %v114 = vunpack.c.l.b16 %v71
    %v115 = vunpack.c.h.b16 %v71
    %v116 = vunpack.c.l.b16 %v72
    %v117 = vunpack.c.h.b16 %v72
    %v118 = vunpack.c.l.b16 %v73
    %v119 = vunpack.c.h.b16 %v73
    %v120 = vpack.c.b16 %v108, %v104
    %v121 = vpack.c.b16 %v109, %v105
    %v122 = vpack.c.b16 %v110, %v106
    %v123 = vpack.c.b16 %v111, %v107
    %v124 = vpack.c.b16 %v116, %v112
    %v125 = vpack.c.b16 %v117, %v113
    %v126 = vpack.c.b16 %v118, %v114
    %v127 = vpack.c.b16 %v119, %v115
    %vm136 = vcmask 261120
    %v138 = vsel %vm136, %v58, 0
    %v141 = vsel %vm136, %v59, 0
    %v144 = vsel %vm136, %v60, 0
    %v147 = vsel %vm136, %v61, 0
    %v150 = vsel %vm136, %v62, 0
    %v153 = vsel %vm136, %v63, 0
    %v156 = vsel %vm136, %v64, 0
    %v159 = vsel %vm136, %v65, 0
    %161 = vmatprep.subr.bf16.mxu0 0
    %162 = vmatpush1.bf16.msra.mxu0 0
    %163 = vmatprep.subr.bf16.mxu0 0
    %164 = vmatpush1.bf16.msra.mxu0 0
    %165 = vmatprep.subr.bf16.mxu0 0
    %166 = vmatpush1.bf16.msra.mxu0 0
    %167 = vmatprep.subr.bf16.mxu0 0
    %168 = vmatpush1.bf16.msra.mxu0 0
    %169 = vmatprep.subr.bf16.mxu0 0
    %170 = vmatpush1.bf16.msra.mxu0 0
    %171 = vmatprep.subr.bf16.mxu0 0
    %172 = vmatpush1.bf16.msra.mxu0 0
    %173 = vmatprep.subr.bf16.mxu0 %v125
    %174 = vmatpush1.bf16.msra.mxu0 %v124
    %175 = vmatprep.subr.bf16.mxu0 %v121
    %176 = vmatpush1.bf16.msra.mxu0 %v120
    %177 = vmatprep.subr.bf16.mxu0 0
    %178 = vmatpush2.bf16.msra.mxu0 0
    %179 = vmatprep.subr.bf16.mxu0 0
    %180 = vmatpush2.bf16.msra.mxu0 0
    %181 = vmatprep.subr.bf16.mxu0 0
    %182 = vmatpush2.bf16.msra.mxu0 0
    %183 = vmatprep.subr.bf16.mxu0 0
    %184 = vmatpush2.bf16.msra.mxu0 0
    %185 = vmatprep.subr.bf16.mxu0 0
    %186 = vmatpush2.bf16.msra.mxu0 0
    %187 = vmatprep.subr.bf16.mxu0 0
    %188 = vmatpush2.bf16.msra.mxu0 0
    %189 = vmatprep.subr.bf16.mxu0 0
    %190 = vmatpush2.bf16.msra.mxu0 0
    %191 = vmatprep.subr.bf16.mxu0 0
    %192 = vmatpush2.bf16.msra.mxu0 0
    %193 = vmatprep.mubr.bf16.mxu0 0
    %194 = vmatmul.mubr.bf16.gmra.mxu0 %v138
    %v195 = vpop.f32.mrf.mxu0
    %v196 = vadd.f32 %v79, %v195
    %v197 = vpop.f32.mrf.mxu0
    %v198 = vadd.f32 %v83, %v197
    %v199 = vpop.f32.mrf.mxu0
    %v200 = vadd.f32 %v79, %v199
    %v201 = vpop.f32.mrf.mxu0
    %v202 = vadd.f32 %v83, %v201
    %203 = vmatprep.mubr.bf16.mxu0 0
    %204 = vmatmul.mubr.bf16.gmra.mxu0 %v141
    %v205 = vpop.f32.mrf.mxu0
    %v206 = vadd.f32 %v79, %v205
    %v207 = vpop.f32.mrf.mxu0
    %v208 = vadd.f32 %v83, %v207
    %v209 = vpop.f32.mrf.mxu0
    %v210 = vadd.f32 %v79, %v209
    %v211 = vpop.f32.mrf.mxu0
    %v212 = vadd.f32 %v83, %v211
    %213 = vmatprep.mubr.bf16.mxu0 0
    %214 = vmatmul.mubr.bf16.gmra.mxu0 %v144
    %v215 = vpop.f32.mrf.mxu0
    %v216 = vadd.f32 %v79, %v215
    %v217 = vpop.f32.mrf.mxu0
    %v218 = vadd.f32 %v83, %v217
    %v219 = vpop.f32.mrf.mxu0
    %v220 = vadd.f32 %v79, %v219
    %v221 = vpop.f32.mrf.mxu0
    %v222 = vadd.f32 %v83, %v221
    %223 = vmatprep.mubr.bf16.mxu0 0
    %224 = vmatmul.mubr.bf16.gmra.mxu0 %v147
    %v225 = vpop.f32.mrf.mxu0
    %v226 = vadd.f32 %v79, %v225
    %v227 = vpop.f32.mrf.mxu0
    %v228 = vadd.f32 %v83, %v227
    %v229 = vpop.f32.mrf.mxu0
    %v230 = vadd.f32 %v79, %v229
    %v231 = vpop.f32.mrf.mxu0
    %v232 = vadd.f32 %v83, %v231
    %233 = vmatprep.mubr.bf16.mxu0 0
    %234 = vmatmul.mubr.bf16.gmra.mxu0 %v150
    %v235 = vpop.f32.mrf.mxu0
    %v236 = vadd.f32 %v79, %v235
    %v237 = vpop.f32.mrf.mxu0
    %v238 = vadd.f32 %v83, %v237
    %v239 = vpop.f32.mrf.mxu0
    %v240 = vadd.f32 %v79, %v239
    %v241 = vpop.f32.mrf.mxu0
    %v242 = vadd.f32 %v83, %v241
    %243 = vmatprep.mubr.bf16.mxu0 0
    %244 = vmatmul.mubr.bf16.gmra.mxu0 %v153
    %v245 = vpop.f32.mrf.mxu0
    %v246 = vadd.f32 %v79, %v245
    %v247 = vpop.f32.mrf.mxu0
    %v248 = vadd.f32 %v83, %v247
    %v249 = vpop.f32.mrf.mxu0
    %v250 = vadd.f32 %v79, %v249
    %v251 = vpop.f32.mrf.mxu0
    %v252 = vadd.f32 %v83, %v251
    %253 = vmatprep.mubr.bf16.mxu0 0
    %254 = vmatmul.mubr.bf16.gmra.mxu0 %v156
    %v255 = vpop.f32.mrf.mxu0
    %v256 = vadd.f32 %v79, %v255
    %v257 = vpop.f32.mrf.mxu0
    %v258 = vadd.f32 %v83, %v257
    %v259 = vpop.f32.mrf.mxu0
    %v260 = vadd.f32 %v79, %v259
    %v261 = vpop.f32.mrf.mxu0
    %v262 = vadd.f32 %v83, %v261
    %263 = vmatprep.mubr.bf16.mxu0 0
    %264 = vmatmul.mubr.bf16.gmra.mxu0 %v159
    %v265 = vpop.f32.mrf.mxu0
    %v266 = vadd.f32 %v79, %v265
    %v267 = vpop.f32.mrf.mxu0
    %v268 = vadd.f32 %v83, %v267
    %v269 = vpop.f32.mrf.mxu0
    %v270 = vadd.f32 %v79, %v269
    %v271 = vpop.f32.mrf.mxu0
    %v272 = vadd.f32 %v83, %v271
    %273 = vdwg.mxu0
    %274 = vmatprep.subr.bf16.mxu0 0
    %275 = vmatpush1.bf16.msra.mxu0 0
    %276 = vmatprep.subr.bf16.mxu0 0
    %277 = vmatpush1.bf16.msra.mxu0 0
    %278 = vmatprep.subr.bf16.mxu0 0
    %279 = vmatpush1.bf16.msra.mxu0 0
    %280 = vmatprep.subr.bf16.mxu0 0
    %281 = vmatpush1.bf16.msra.mxu0 0
    %282 = vmatprep.subr.bf16.mxu0 0
    %283 = vmatpush1.bf16.msra.mxu0 0
    %284 = vmatprep.subr.bf16.mxu0 0
    %285 = vmatpush1.bf16.msra.mxu0 0
    %286 = vmatprep.subr.bf16.mxu0 %v127
    %287 = vmatpush1.bf16.msra.mxu0 %v126
    %288 = vmatprep.subr.bf16.mxu0 %v123
    %289 = vmatpush1.bf16.msra.mxu0 %v122
    %290 = vmatprep.subr.bf16.mxu0 0
    %291 = vmatpush2.bf16.msra.mxu0 0
    %292 = vmatprep.subr.bf16.mxu0 0
    %293 = vmatpush2.bf16.msra.mxu0 0
    %294 = vmatprep.subr.bf16.mxu0 0
    %295 = vmatpush2.bf16.msra.mxu0 0
    %296 = vmatprep.subr.bf16.mxu0 0
    %297 = vmatpush2.bf16.msra.mxu0 0
    %298 = vmatprep.subr.bf16.mxu0 0
    %299 = vmatpush2.bf16.msra.mxu0 0
    %300 = vmatprep.subr.bf16.mxu0 0
    %301 = vmatpush2.bf16.msra.mxu0 0
    %302 = vmatprep.subr.bf16.mxu0 0
    %303 = vmatpush2.bf16.msra.mxu0 0
    %304 = vmatprep.subr.bf16.mxu0 0
    %305 = vmatpush2.bf16.msra.mxu0 0
    %306 = vmatprep.mubr.bf16.mxu0 0
    %307 = vmatmul.mubr.bf16.gmra.mxu0 %v138
    %v308 = vpop.f32.mrf.mxu0
    %v309 = vadd.f32 %v87, %v308
    %v310 = vpop.f32.mrf.mxu0
    %v311 = vadd.f32 %v91, %v310
    %v312 = vpop.f32.mrf.mxu0
    %v313 = vadd.f32 %v87, %v312
    %v314 = vpop.f32.mrf.mxu0
    %v315 = vadd.f32 %v91, %v314
    %316 = vmatprep.mubr.bf16.mxu0 0
    %317 = vmatmul.mubr.bf16.gmra.mxu0 %v141
    %v318 = vpop.f32.mrf.mxu0
    %v319 = vadd.f32 %v87, %v318
    %v320 = vpop.f32.mrf.mxu0
    %v321 = vadd.f32 %v91, %v320
    %v322 = vpop.f32.mrf.mxu0
    %v323 = vadd.f32 %v87, %v322
    %v324 = vpop.f32.mrf.mxu0
    %v325 = vadd.f32 %v91, %v324
    %326 = vmatprep.mubr.bf16.mxu0 0
    %327 = vmatmul.mubr.bf16.gmra.mxu0 %v144
    %v328 = vpop.f32.mrf.mxu0
    %v329 = vadd.f32 %v87, %v328
    %v330 = vpop.f32.mrf.mxu0
    %v331 = vadd.f32 %v91, %v330
    %v332 = vpop.f32.mrf.mxu0
    %v333 = vadd.f32 %v87, %v332
    %v334 = vpop.f32.mrf.mxu0
    %v335 = vadd.f32 %v91, %v334
    %336 = vmatprep.mubr.bf16.mxu0 0
    %337 = vmatmul.mubr.bf16.gmra.mxu0 %v147
    %v338 = vpop.f32.mrf.mxu0
    %v339 = vadd.f32 %v87, %v338
    %v340 = vpop.f32.mrf.mxu0
    %v341 = vadd.f32 %v91, %v340
    %v342 = vpop.f32.mrf.mxu0
    %v343 = vadd.f32 %v87, %v342
    %v344 = vpop.f32.mrf.mxu0
    %v345 = vadd.f32 %v91, %v344
    %346 = vmatprep.mubr.bf16.mxu0 0
    %347 = vmatmul.mubr.bf16.gmra.mxu0 %v150
    %v348 = vpop.f32.mrf.mxu0
    %v349 = vadd.f32 %v87, %v348
    %v350 = vpop.f32.mrf.mxu0
    %v351 = vadd.f32 %v91, %v350
    %v352 = vpop.f32.mrf.mxu0
    %v353 = vadd.f32 %v87, %v352
    %v354 = vpop.f32.mrf.mxu0
    %v355 = vadd.f32 %v91, %v354
    %356 = vmatprep.mubr.bf16.mxu0 0
    %357 = vmatmul.mubr.bf16.gmra.mxu0 %v153
    %v358 = vpop.f32.mrf.mxu0
    %v359 = vadd.f32 %v87, %v358
    %v360 = vpop.f32.mrf.mxu0
    %v361 = vadd.f32 %v91, %v360
    %v362 = vpop.f32.mrf.mxu0
    %v363 = vadd.f32 %v87, %v362
    %v364 = vpop.f32.mrf.mxu0
    %v365 = vadd.f32 %v91, %v364
    %366 = vmatprep.mubr.bf16.mxu0 0
    %367 = vmatmul.mubr.bf16.gmra.mxu0 %v156
    %v368 = vpop.f32.mrf.mxu0
    %v369 = vadd.f32 %v87, %v368
    %v370 = vpop.f32.mrf.mxu0
    %v371 = vadd.f32 %v91, %v370
    %v372 = vpop.f32.mrf.mxu0
    %v373 = vadd.f32 %v87, %v372
    %v374 = vpop.f32.mrf.mxu0
    %v375 = vadd.f32 %v91, %v374
    %376 = vmatprep.mubr.bf16.mxu0 0
    %377 = vmatmul.mubr.bf16.gmra.mxu0 %v159
    %v378 = vpop.f32.mrf.mxu0
    %v379 = vadd.f32 %v87, %v378
    %v380 = vpop.f32.mrf.mxu0
    %v381 = vadd.f32 %v91, %v380
    %v382 = vpop.f32.mrf.mxu0
    %v383 = vadd.f32 %v87, %v382
    %v384 = vpop.f32.mrf.mxu0
    %v385 = vadd.f32 %v91, %v384
    %386 = vdwg.mxu0
    %v387 = vmax.f32 %v196, 0.0
    %v388 = vmax.f32 %v198, 0.0
    %v389 = vmax.f32 %v309, 0.0
    %v390 = vmax.f32 %v311, 0.0
    %v391 = vmax.f32 %v200, 0.0
    %v392 = vmax.f32 %v202, 0.0
    %v393 = vmax.f32 %v313, 0.0
    %v394 = vmax.f32 %v315, 0.0
    %v395 = vmax.f32 %v206, 0.0
    %v396 = vmax.f32 %v208, 0.0
    %v397 = vmax.f32 %v319, 0.0
    %v398 = vmax.f32 %v321, 0.0
    %v399 = vmax.f32 %v210, 0.0
    %v400 = vmax.f32 %v212, 0.0
    %v401 = vmax.f32 %v323, 0.0
    %v402 = vmax.f32 %v325, 0.0
    %v403 = vmax.f32 %v216, 0.0
    %v404 = vmax.f32 %v218, 0.0
    %v405 = vmax.f32 %v329, 0.0
    %v406 = vmax.f32 %v331, 0.0
    %v407 = vmax.f32 %v220, 0.0
    %v408 = vmax.f32 %v222, 0.0
    %v409 = vmax.f32 %v333, 0.0
    %v410 = vmax.f32 %v335, 0.0
    %v411 = vmax.f32 %v226, 0.0
    %v412 = vmax.f32 %v228, 0.0
    %v413 = vmax.f32 %v339, 0.0
    %v414 = vmax.f32 %v341, 0.0
    %v415 = vmax.f32 %v230, 0.0
    %v416 = vmax.f32 %v232, 0.0
    %v417 = vmax.f32 %v343, 0.0
    %v418 = vmax.f32 %v345, 0.0
    %v419 = vmax.f32 %v236, 0.0
    %v420 = vmax.f32 %v238, 0.0
    %v421 = vmax.f32 %v349, 0.0
    %v422 = vmax.f32 %v351, 0.0
    %v423 = vmax.f32 %v240, 0.0
    %v424 = vmax.f32 %v242, 0.0
    %v425 = vmax.f32 %v353, 0.0
    %v426 = vmax.f32 %v355, 0.0
    %v427 = vmax.f32 %v246, 0.0
    %v428 = vmax.f32 %v248, 0.0
    %v429 = vmax.f32 %v359, 0.0
    %v430 = vmax.f32 %v361, 0.0
    %v431 = vmax.f32 %v250, 0.0
    %v432 = vmax.f32 %v252, 0.0
    %v433 = vmax.f32 %v363, 0.0
    %v434 = vmax.f32 %v365, 0.0
    %v435 = vmax.f32 %v256, 0.0
    %v436 = vmax.f32 %v258, 0.0
    %v437 = vmax.f32 %v369, 0.0
    %v438 = vmax.f32 %v371, 0.0
    %v439 = vmax.f32 %v260, 0.0
    %v440 = vmax.f32 %v262, 0.0
    %v441 = vmax.f32 %v373, 0.0
    %v442 = vmax.f32 %v375, 0.0
    %v443 = vmax.f32 %v266, 0.0
    %v444 = vmax.f32 %v268, 0.0
    %v445 = vmax.f32 %v379, 0.0
    %v446 = vmax.f32 %v381, 0.0
    %v447 = vmax.f32 %v270, 0.0
    %v448 = vmax.f32 %v272, 0.0
    %v449 = vmax.f32 %v383, 0.0
    %v450 = vmax.f32 %v385, 0.0
    %v451 = vpack.c.bf16 %v391, %v387
    %v452 = vpack.c.bf16 %v392, %v388
    %v453 = vpack.c.bf16 %v393, %v389
    %v454 = vpack.c.bf16 %v394, %v390
    %v455 = vpack.c.bf16 %v399, %v395
    %v456 = vpack.c.bf16 %v400, %v396
    %v457 = vpack.c.bf16 %v401, %v397
    %v458 = vpack.c.bf16 %v402, %v398
    %v459 = vpack.c.bf16 %v407, %v403
    %v460 = vpack.c.bf16 %v408, %v404
    %v461 = vpack.c.bf16 %v409, %v405
    %v462 = vpack.c.bf16 %v410, %v406
    %v463 = vpack.c.bf16 %v415, %v411
    %v464 = vpack.c.bf16 %v416, %v412
    %v465 = vpack.c.bf16 %v417, %v413
    %v466 = vpack.c.bf16 %v418, %v414
    %v467 = vpack.c.bf16 %v423, %v419
    %v468 = vpack.c.bf16 %v424, %v420
    %v469 = vpack.c.bf16 %v425, %v421
    %v470 = vpack.c.bf16 %v426, %v422
    %v471 = vpack.c.bf16 %v431, %v427
    %v472 = vpack.c.bf16 %v432, %v428
    %v473 = vpack.c.bf16 %v433, %v429
    %v474 = vpack.c.bf16 %v434, %v430
    %v475 = vpack.c.bf16 %v439, %v435
    %v476 = vpack.c.bf16 %v440, %v436
    %v477 = vpack.c.bf16 %v441, %v437
    %v478 = vpack.c.bf16 %v442, %v438
    %v479 = vpack.c.bf16 %v447, %v443
    %v480 = vpack.c.bf16 %v448, %v444
    %v481 = vpack.c.bf16 %v449, %v445
    %v482 = vpack.c.bf16 %v450, %v446
    %v483 = vld [vmem:[#allocation3] sm:$0xff]
    %v484 = vld [vmem:[#allocation3 + $0x8] sm:$0xff]
    %v485 = vld [vmem:[#allocation3 + $0x10] sm:$0xff]
    %v486 = vld [vmem:[#allocation3 + $0x18] sm:$0xff]
    %v487 = vld [vmem:[#allocation3 + $0x20] sm:$0xff]
    %v488 = vld [vmem:[#allocation3 + $0x28] sm:$0xff]
    %v489 = vld [vmem:[#allocation3 + $0x30] sm:$0xff]
    %v490 = vld [vmem:[#allocation3 + $0x38] sm:$0xff]
    %v491 = vld [vmem:[#allocation3 + $0x40] sm:$0xff]
    %v492 = vld [vmem:[#allocation3 + $0x48] sm:$0xff]
    %v493 = vld [vmem:[#allocation3 + $0x50] sm:$0xff]
    %v494 = vld [vmem:[#allocation3 + $0x58] sm:$0xff]
    %v495 = vld [vmem:[#allocation3 + $0x60] sm:$0xff]
    %v496 = vld [vmem:[#allocation3 + $0x68] sm:$0xff]
    %v497 = vld [vmem:[#allocation3 + $0x70] sm:$0xff]
    %v498 = vld [vmem:[#allocation3 + $0x78] sm:$0xff]
    %v499 = vld [vmem:[#allocation3 + $0x80] sm:$0xff]
    %v500 = vld [vmem:[#allocation3 + $0x88] sm:$0xff]
    %v501 = vld [vmem:[#allocation3 + $0x90] sm:$0xff]
    %v502 = vld [vmem:[#allocation3 + $0x98] sm:$0xff]
    %v503 = vld [vmem:[#allocation3 + $0xa0] sm:$0xff]
    %v504 = vld [vmem:[#allocation3 + $0xa8] sm:$0xff]
    %v505 = vld [vmem:[#allocation3 + $0xb0] sm:$0xff]
    %v506 = vld [vmem:[#allocation3 + $0xb8] sm:$0xff]
    %v507 = vld [vmem:[#allocation3 + $0xc0] sm:$0xff]
    %v508 = vld [vmem:[#allocation3 + $0xc8] sm:$0xff]
    %v509 = vld [vmem:[#allocation3 + $0xd0] sm:$0xff]
    %v510 = vld [vmem:[#allocation3 + $0xd8] sm:$0xff]
    %v511 = vld [vmem:[#allocation3 + $0xe0] sm:$0xff]
    %v512 = vld [vmem:[#allocation3 + $0xe8] sm:$0xff]
    %v513 = vld [vmem:[#allocation3 + $0xf0] sm:$0xff]
    %v514 = vld [vmem:[#allocation3 + $0xf8] sm:$0xff]
    %v515 = vld [vmem:[#allocation3 + $0x100] sm:$0xff]
    %v516 = vld [vmem:[#allocation3 + $0x108] sm:$0xff]
    %v517 = vld [vmem:[#allocation3 + $0x110] sm:$0xff]
    %v518 = vld [vmem:[#allocation3 + $0x118] sm:$0xff]
    %v519 = vld [vmem:[#allocation3 + $0x120] sm:$0xff]
    %v520 = vld [vmem:[#allocation3 + $0x128] sm:$0xff]
    %v521 = vld [vmem:[#allocation3 + $0x130] sm:$0xff]
    %v522 = vld [vmem:[#allocation3 + $0x138] sm:$0xff]
    %v523 = vld [vmem:[#allocation3 + $0x140] sm:$0xff]
    %v524 = vld [vmem:[#allocation3 + $0x148] sm:$0xff]
    %v525 = vld [vmem:[#allocation3 + $0x150] sm:$0xff]
    %v526 = vld [vmem:[#allocation3 + $0x158] sm:$0xff]
    %v527 = vld [vmem:[#allocation3 + $0x160] sm:$0xff]
    %v528 = vld [vmem:[#allocation3 + $0x168] sm:$0xff]
    %v529 = vld [vmem:[#allocation3 + $0x170] sm:$0xff]
    %v530 = vld [vmem:[#allocation3 + $0x178] sm:$0xff]
    %v531 = vld [vmem:[#allocation3 + $0x180] sm:$0xff]
    %v532 = vld [vmem:[#allocation3 + $0x188] sm:$0xff]
    %v533 = vld [vmem:[#allocation3 + $0x190] sm:$0xff]
    %v534 = vld [vmem:[#allocation3 + $0x198] sm:$0xff]
    %v535 = vld [vmem:[#allocation3 + $0x1a0] sm:$0xff]
    %v536 = vld [vmem:[#allocation3 + $0x1a8] sm:$0xff]
    %v537 = vld [vmem:[#allocation3 + $0x1b0] sm:$0xff]
    %v538 = vld [vmem:[#allocation3 + $0x1b8] sm:$0xff]
    %v539 = vld [vmem:[#allocation3 + $0x1c0] sm:$0xff]
    %v540 = vld [vmem:[#allocation3 + $0x1c8] sm:$0xff]
    %v541 = vld [vmem:[#allocation3 + $0x1d0] sm:$0xff]
    %v542 = vld [vmem:[#allocation3 + $0x1d8] sm:$0xff]
    %v543 = vld [vmem:[#allocation3 + $0x1e0] sm:$0xff]
    %v544 = vld [vmem:[#allocation3 + $0x1e8] sm:$0xff]
    %v545 = vld [vmem:[#allocation3 + $0x1f0] sm:$0xff]
    %v546 = vld [vmem:[#allocation3 + $0x1f8] sm:$0xff]
    %v547 = vld [vmem:[#allocation3 + $0x200] sm:$0xff]
    %v548 = vld [vmem:[#allocation3 + $0x208] sm:$0xff]
    %v549 = vld [vmem:[#allocation3 + $0x210] sm:$0xff]
    %v550 = vld [vmem:[#allocation3 + $0x218] sm:$0xff]
    %v551 = vld [vmem:[#allocation3 + $0x220] sm:$0xff]
    %v552 = vld [vmem:[#allocation3 + $0x228] sm:$0xff]
    %v553 = vld [vmem:[#allocation3 + $0x230] sm:$0xff]
    %v554 = vld [vmem:[#allocation3 + $0x238] sm:$0xff]
    %v555 = vld [vmem:[#allocation3 + $0x240] sm:$0xff]
    %v556 = vld [vmem:[#allocation3 + $0x248] sm:$0xff]
    %v557 = vld [vmem:[#allocation3 + $0x250] sm:$0xff]
    %v558 = vld [vmem:[#allocation3 + $0x258] sm:$0xff]
    %v559 = vld [vmem:[#allocation3 + $0x260] sm:$0xff]
    %v560 = vld [vmem:[#allocation3 + $0x268] sm:$0xff]
    %v561 = vld [vmem:[#allocation3 + $0x270] sm:$0xff]
    %v562 = vld [vmem:[#allocation3 + $0x278] sm:$0xff]
    %v563 = vld [vmem:[#allocation3 + $0x280] sm:$0xff]
    %v564 = vld [vmem:[#allocation3 + $0x288] sm:$0xff]
    %v565 = vld [vmem:[#allocation3 + $0x290] sm:$0xff]
    %v566 = vld [vmem:[#allocation3 + $0x298] sm:$0xff]
    %v567 = vld [vmem:[#allocation3 + $0x2a0] sm:$0xff]
    %v568 = vld [vmem:[#allocation3 + $0x2a8] sm:$0xff]
    %v569 = vld [vmem:[#allocation3 + $0x2b0] sm:$0xff]
    %v570 = vld [vmem:[#allocation3 + $0x2b8] sm:$0xff]
    %v571 = vld [vmem:[#allocation3 + $0x2c0] sm:$0xff]
    %v572 = vld [vmem:[#allocation3 + $0x2c8] sm:$0xff]
    %v573 = vld [vmem:[#allocation3 + $0x2d0] sm:$0xff]
    %v574 = vld [vmem:[#allocation3 + $0x2d8] sm:$0xff]
    %v575 = vld [vmem:[#allocation3 + $0x2e0] sm:$0xff]
    %v576 = vld [vmem:[#allocation3 + $0x2e8] sm:$0xff]
    %v577 = vld [vmem:[#allocation3 + $0x2f0] sm:$0xff]
    %v578 = vld [vmem:[#allocation3 + $0x2f8] sm:$0xff]
    %v579 = vld [vmem:[#allocation3 + $0x300] sm:$0xff]
    %v580 = vld [vmem:[#allocation3 + $0x308] sm:$0xff]
    %v581 = vld [vmem:[#allocation3 + $0x310] sm:$0xff]
    %v582 = vld [vmem:[#allocation3 + $0x318] sm:$0xff]
    %v583 = vld [vmem:[#allocation3 + $0x320] sm:$0xff]
    %v584 = vld [vmem:[#allocation3 + $0x328] sm:$0xff]
    %v585 = vld [vmem:[#allocation3 + $0x330] sm:$0xff]
    %v586 = vld [vmem:[#allocation3 + $0x338] sm:$0xff]
    %v587 = vld [vmem:[#allocation3 + $0x340] sm:$0xff]
    %v588 = vld [vmem:[#allocation3 + $0x348] sm:$0xff]
    %v589 = vld [vmem:[#allocation3 + $0x350] sm:$0xff]
    %v590 = vld [vmem:[#allocation3 + $0x358] sm:$0xff]
    %v591 = vld [vmem:[#allocation3 + $0x360] sm:$0xff]
    %v592 = vld [vmem:[#allocation3 + $0x368] sm:$0xff]
    %v593 = vld [vmem:[#allocation3 + $0x370] sm:$0xff]
    %v594 = vld [vmem:[#allocation3 + $0x378] sm:$0xff]
    %v595 = vld [vmem:[#allocation3 + $0x380] sm:$0xff]
    %v596 = vld [vmem:[#allocation3 + $0x388] sm:$0xff]
    %v597 = vld [vmem:[#allocation3 + $0x390] sm:$0xff]
    %v598 = vld [vmem:[#allocation3 + $0x398] sm:$0xff]
    %v599 = vld [vmem:[#allocation3 + $0x3a0] sm:$0xff]
    %v600 = vld [vmem:[#allocation3 + $0x3a8] sm:$0xff]
    %v601 = vld [vmem:[#allocation3 + $0x3b0] sm:$0xff]
    %v602 = vld [vmem:[#allocation3 + $0x3b8] sm:$0xff]
    %v603 = vld [vmem:[#allocation3 + $0x3c0] sm:$0xff]
    %v604 = vld [vmem:[#allocation3 + $0x3c8] sm:$0xff]
    %v605 = vld [vmem:[#allocation3 + $0x3d0] sm:$0xff]
    %v606 = vld [vmem:[#allocation3 + $0x3d8] sm:$0xff]
    %v607 = vld [vmem:[#allocation3 + $0x3e0] sm:$0xff]
    %v608 = vld [vmem:[#allocation3 + $0x3e8] sm:$0xff]
    %v609 = vld [vmem:[#allocation3 + $0x3f0] sm:$0xff]
    %v610 = vld [vmem:[#allocation3 + $0x3f8] sm:$0xff]
    %v611 = vld [vmem:[%s4] sm:$0xf]
    %v613 = vlaneseq
    %v614 = vshrl.u32 %v613, 7
    %v615 = vsub.s32 0, %v614
    %v616 = vrot.slane %v611, %v615
    %v617 = vlaneseq
    %v618 = vshrl.u32 %v617, 7
    %v619 = vsub.s32 1, %v618
    %v620 = vrot.slane %v611, %v619
    %v621 = vlaneseq
    %v622 = vshrl.u32 %v621, 7
    %v623 = vsub.s32 2, %v622
    %v624 = vrot.slane %v611, %v623
    %v625 = vlaneseq
    %v626 = vshrl.u32 %v625, 7
    %v627 = vsub.s32 3, %v626
    %v628 = vrot.slane %v611, %v627
    %v761 = vunpack.c.l.b16 %v483
    %v762 = vunpack.c.h.b16 %v483
    %v763 = vunpack.c.l.b16 %v484
    %v764 = vunpack.c.h.b16 %v484
    %v765 = vunpack.c.l.b16 %v485
    %v766 = vunpack.c.h.b16 %v485
    %v767 = vunpack.c.l.b16 %v486
    %v768 = vunpack.c.h.b16 %v486
    %v769 = vunpack.c.l.b16 %v487
    %v770 = vunpack.c.h.b16 %v487
    %v771 = vunpack.c.l.b16 %v488
    %v772 = vunpack.c.h.b16 %v488
    %v773 = vunpack.c.l.b16 %v489
    %v774 = vunpack.c.h.b16 %v489
    %v775 = vunpack.c.l.b16 %v490
    %v776 = vunpack.c.h.b16 %v490
    %v777 = vunpack.c.l.b16 %v491
    %v778 = vunpack.c.h.b16 %v491
    %v779 = vunpack.c.l.b16 %v492
    %v780 = vunpack.c.h.b16 %v492
    %v781 = vunpack.c.l.b16 %v493
    %v782 = vunpack.c.h.b16 %v493
    %v783 = vunpack.c.l.b16 %v494
    %v784 = vunpack.c.h.b16 %v494
    %v785 = vunpack.c.l.b16 %v495
    %v786 = vunpack.c.h.b16 %v495
    %v787 = vunpack.c.l.b16 %v496
    %v788 = vunpack.c.h.b16 %v496
    %v789 = vunpack.c.l.b16 %v497
    %v790 = vunpack.c.h.b16 %v497
    %v791 = vunpack.c.l.b16 %v498
    %v792 = vunpack.c.h.b16 %v498
    %v793 = vunpack.c.l.b16 %v499
    %v794 = vunpack.c.h.b16 %v499
    %v795 = vunpack.c.l.b16 %v500
    %v796 = vunpack.c.h.b16 %v500
    %v797 = vunpack.c.l.b16 %v501
    %v798 = vunpack.c.h.b16 %v501
    %v799 = vunpack.c.l.b16 %v502
    %v800 = vunpack.c.h.b16 %v502
    %v801 = vunpack.c.l.b16 %v503
    %v802 = vunpack.c.h.b16 %v503
    %v803 = vunpack.c.l.b16 %v504
    %v804 = vunpack.c.h.b16 %v504
    %v805 = vunpack.c.l.b16 %v505
    %v806 = vunpack.c.h.b16 %v505
    %v807 = vunpack.c.l.b16 %v506
    %v808 = vunpack.c.h.b16 %v506
    %v809 = vunpack.c.l.b16 %v507
    %v810 = vunpack.c.h.b16 %v507
    %v811 = vunpack.c.l.b16 %v508
    %v812 = vunpack.c.h.b16 %v508
    %v813 = vunpack.c.l.b16 %v509
    %v814 = vunpack.c.h.b16 %v509
    %v815 = vunpack.c.l.b16 %v510
    %v816 = vunpack.c.h.b16 %v510
    %v817 = vunpack.c.l.b16 %v511
    %v818 = vunpack.c.h.b16 %v511
    %v819 = vunpack.c.l.b16 %v512
    %v820 = vunpack.c.h.b16 %v512
    %v821 = vunpack.c.l.b16 %v513
    %v822 = vunpack.c.h.b16 %v513
    %v823 = vunpack.c.l.b16 %v514
    %v824 = vunpack.c.h.b16 %v514
    %v825 = vunpack.c.l.b16 %v515
    %v826 = vunpack.c.h.b16 %v515
    %v827 = vunpack.c.l.b16 %v516
    %v828 = vunpack.c.h.b16 %v516
    %v829 = vunpack.c.l.b16 %v517
    %v830 = vunpack.c.h.b16 %v517
    %v831 = vunpack.c.l.b16 %v518
    %v832 = vunpack.c.h.b16 %v518
    %v833 = vunpack.c.l.b16 %v519
    %v834 = vunpack.c.h.b16 %v519
    %v835 = vunpack.c.l.b16 %v520
    %v836 = vunpack.c.h.b16 %v520
    %v837 = vunpack.c.l.b16 %v521
    %v838 = vunpack.c.h.b16 %v521
    %v839 = vunpack.c.l.b16 %v522
    %v840 = vunpack.c.h.b16 %v522
    %v841 = vunpack.c.l.b16 %v523
    %v842 = vunpack.c.h.b16 %v523
    %v843 = vunpack.c.l.b16 %v524
    %v844 = vunpack.c.h.b16 %v524
    %v845 = vunpack.c.l.b16 %v525
    %v846 = vunpack.c.h.b16 %v525
    %v847 = vunpack.c.l.b16 %v526
    %v848 = vunpack.c.h.b16 %v526
    %v849 = vunpack.c.l.b16 %v527
    %v850 = vunpack.c.h.b16 %v527
    %v851 = vunpack.c.l.b16 %v528
    %v852 = vunpack.c.h.b16 %v528
    %v853 = vunpack.c.l.b16 %v529
    %v854 = vunpack.c.h.b16 %v529
    %v855 = vunpack.c.l.b16 %v530
    %v856 = vunpack.c.h.b16 %v530
    %v857 = vunpack.c.l.b16 %v531
    %v858 = vunpack.c.h.b16 %v531
    %v859 = vunpack.c.l.b16 %v532
    %v860 = vunpack.c.h.b16 %v532
    %v861 = vunpack.c.l.b16 %v533
    %v862 = vunpack.c.h.b16 %v533
    %v863 = vunpack.c.l.b16 %v534
    %v864 = vunpack.c.h.b16 %v534
    %v865 = vunpack.c.l.b16 %v535
    %v866 = vunpack.c.h.b16 %v535
    %v867 = vunpack.c.l.b16 %v536
    %v868 = vunpack.c.h.b16 %v536
    %v869 = vunpack.c.l.b16 %v537
    %v870 = vunpack.c.h.b16 %v537
    %v871 = vunpack.c.l.b16 %v538
    %v872 = vunpack.c.h.b16 %v538
    %v873 = vunpack.c.l.b16 %v539
    %v874 = vunpack.c.h.b16 %v539
    %v875 = vunpack.c.l.b16 %v540
    %v876 = vunpack.c.h.b16 %v540
    %v877 = vunpack.c.l.b16 %v541
    %v878 = vunpack.c.h.b16 %v541
    %v879 = vunpack.c.l.b16 %v542
    %v880 = vunpack.c.h.b16 %v542
    %v881 = vunpack.c.l.b16 %v543
    %v882 = vunpack.c.h.b16 %v543
    %v883 = vunpack.c.l.b16 %v544
    %v884 = vunpack.c.h.b16 %v544
    %v885 = vunpack.c.l.b16 %v545
    %v886 = vunpack.c.h.b16 %v545
    %v887 = vunpack.c.l.b16 %v546
    %v888 = vunpack.c.h.b16 %v546
    %v889 = vunpack.c.l.b16 %v547
    %v890 = vunpack.c.h.b16 %v547
    %v891 = vunpack.c.l.b16 %v548
    %v892 = vunpack.c.h.b16 %v548
    %v893 = vunpack.c.l.b16 %v549
    %v894 = vunpack.c.h.b16 %v549
    %v895 = vunpack.c.l.b16 %v550
    %v896 = vunpack.c.h.b16 %v550
    %v897 = vunpack.c.l.b16 %v551
    %v898 = vunpack.c.h.b16 %v551
    %v899 = vunpack.c.l.b16 %v552
    %v900 = vunpack.c.h.b16 %v552
    %v901 = vunpack.c.l.b16 %v553
    %v902 = vunpack.c.h.b16 %v553
    %v903 = vunpack.c.l.b16 %v554
    %v904 = vunpack.c.h.b16 %v554
    %v905 = vunpack.c.l.b16 %v555
    %v906 = vunpack.c.h.b16 %v555
    %v907 = vunpack.c.l.b16 %v556
    %v908 = vunpack.c.h.b16 %v556
    %v909 = vunpack.c.l.b16 %v557
    %v910 = vunpack.c.h.b16 %v557
    %v911 = vunpack.c.l.b16 %v558
    %v912 = vunpack.c.h.b16 %v558
    %v913 = vunpack.c.l.b16 %v559
    %v914 = vunpack.c.h.b16 %v559
    %v915 = vunpack.c.l.b16 %v560
    %v916 = vunpack.c.h.b16 %v560
    %v917 = vunpack.c.l.b16 %v561
    %v918 = vunpack.c.h.b16 %v561
    %v919 = vunpack.c.l.b16 %v562
    %v920 = vunpack.c.h.b16 %v562
    %v921 = vunpack.c.l.b16 %v563
    %v922 = vunpack.c.h.b16 %v563
    %v923 = vunpack.c.l.b16 %v564
    %v924 = vunpack.c.h.b16 %v564
    %v925 = vunpack.c.l.b16 %v565
    %v926 = vunpack.c.h.b16 %v565
    %v927 = vunpack.c.l.b16 %v566
    %v928 = vunpack.c.h.b16 %v566
    %v929 = vunpack.c.l.b16 %v567
    %v930 = vunpack.c.h.b16 %v567
    %v931 = vunpack.c.l.b16 %v568
    %v932 = vunpack.c.h.b16 %v568
    %v933 = vunpack.c.l.b16 %v569
    %v934 = vunpack.c.h.b16 %v569
    %v935 = vunpack.c.l.b16 %v570
    %v936 = vunpack.c.h.b16 %v570
    %v937 = vunpack.c.l.b16 %v571
    %v938 = vunpack.c.h.b16 %v571
    %v939 = vunpack.c.l.b16 %v572
    %v940 = vunpack.c.h.b16 %v572
    %v941 = vunpack.c.l.b16 %v573
    %v942 = vunpack.c.h.b16 %v573
    %v943 = vunpack.c.l.b16 %v574
    %v944 = vunpack.c.h.b16 %v574
    %v945 = vunpack.c.l.b16 %v575
    %v946 = vunpack.c.h.b16 %v575
    %v947 = vunpack.c.l.b16 %v576
    %v948 = vunpack.c.h.b16 %v576
    %v949 = vunpack.c.l.b16 %v577
    %v950 = vunpack.c.h.b16 %v577
    %v951 = vunpack.c.l.b16 %v578
    %v952 = vunpack.c.h.b16 %v578
    %v953 = vunpack.c.l.b16 %v579
    %v954 = vunpack.c.h.b16 %v579
    %v955 = vunpack.c.l.b16 %v580
    %v956 = vunpack.c.h.b16 %v580
    %v957 = vunpack.c.l.b16 %v581
    %v958 = vunpack.c.h.b16 %v581
    %v959 = vunpack.c.l.b16 %v582
    %v960 = vunpack.c.h.b16 %v582
    %v961 = vunpack.c.l.b16 %v583
    %v962 = vunpack.c.h.b16 %v583
    %v963 = vunpack.c.l.b16 %v584
    %v964 = vunpack.c.h.b16 %v584
    %v965 = vunpack.c.l.b16 %v585
    %v966 = vunpack.c.h.b16 %v585
    %v967 = vunpack.c.l.b16 %v586
    %v968 = vunpack.c.h.b16 %v586
    %v969 = vunpack.c.l.b16 %v587
    %v970 = vunpack.c.h.b16 %v587
    %v971 = vunpack.c.l.b16 %v588
    %v972 = vunpack.c.h.b16 %v588
    %v973 = vunpack.c.l.b16 %v589
    %v974 = vunpack.c.h.b16 %v589
    %v975 = vunpack.c.l.b16 %v590
    %v976 = vunpack.c.h.b16 %v590
    %v977 = vunpack.c.l.b16 %v591
    %v978 = vunpack.c.h.b16 %v591
    %v979 = vunpack.c.l.b16 %v592
    %v980 = vunpack.c.h.b16 %v592
    %v981 = vunpack.c.l.b16 %v593
    %v982 = vunpack.c.h.b16 %v593
    %v983 = vunpack.c.l.b16 %v594
    %v984 = vunpack.c.h.b16 %v594
    %v985 = vunpack.c.l.b16 %v595
    %v986 = vunpack.c.h.b16 %v595
    %v987 = vunpack.c.l.b16 %v596
    %v988 = vunpack.c.h.b16 %v596
    %v989 = vunpack.c.l.b16 %v597
    %v990 = vunpack.c.h.b16 %v597
    %v991 = vunpack.c.l.b16 %v598
    %v992 = vunpack.c.h.b16 %v598
    %v993 = vunpack.c.l.b16 %v599
    %v994 = vunpack.c.h.b16 %v599
    %v995 = vunpack.c.l.b16 %v600
    %v996 = vunpack.c.h.b16 %v600
    %v997 = vunpack.c.l.b16 %v601
    %v998 = vunpack.c.h.b16 %v601
    %v999 = vunpack.c.l.b16 %v602
    %v1000 = vunpack.c.h.b16 %v602
    %v1001 = vunpack.c.l.b16 %v603
    %v1002 = vunpack.c.h.b16 %v603
    %v1003 = vunpack.c.l.b16 %v604
    %v1004 = vunpack.c.h.b16 %v604
    %v1005 = vunpack.c.l.b16 %v605
    %v1006 = vunpack.c.h.b16 %v605
    %v1007 = vunpack.c.l.b16 %v606
    %v1008 = vunpack.c.h.b16 %v606
    %v1009 = vunpack.c.l.b16 %v607
    %v1010 = vunpack.c.h.b16 %v607
    %v1011 = vunpack.c.l.b16 %v608
    %v1012 = vunpack.c.h.b16 %v608
    %v1013 = vunpack.c.l.b16 %v609
    %v1014 = vunpack.c.h.b16 %v609
    %v1015 = vunpack.c.l.b16 %v610
    %v1016 = vunpack.c.h.b16 %v610
    %v1017 = vpack.c.b16 %v765, %v761
    %v1018 = vpack.c.b16 %v766, %v762
    %v1019 = vpack.c.b16 %v767, %v763
    %v1020 = vpack.c.b16 %v768, %v764
    %v1021 = vpack.c.b16 %v773, %v769
    %v1022 = vpack.c.b16 %v774, %v770
    %v1023 = vpack.c.b16 %v775, %v771
    %v1024 = vpack.c.b16 %v776, %v772
    %v1025 = vpack.c.b16 %v781, %v777
    %v1026 = vpack.c.b16 %v782, %v778
    %v1027 = vpack.c.b16 %v783, %v779
    %v1028 = vpack.c.b16 %v784, %v780
    %v1029 = vpack.c.b16 %v789, %v785
    %v1030 = vpack.c.b16 %v790, %v786
    %v1031 = vpack.c.b16 %v791, %v787
    %v1032 = vpack.c.b16 %v792, %v788
    %v1033 = vpack.c.b16 %v797, %v793
    %v1034 = vpack.c.b16 %v798, %v794
    %v1035 = vpack.c.b16 %v799, %v795
    %v1036 = vpack.c.b16 %v800, %v796
    %v1037 = vpack.c.b16 %v805, %v801
    %v1038 = vpack.c.b16 %v806, %v802
    %v1039 = vpack.c.b16 %v807, %v803
    %v1040 = vpack.c.b16 %v808, %v804
    %v1041 = vpack.c.b16 %v813, %v809
    %v1042 = vpack.c.b16 %v814, %v810
    %v1043 = vpack.c.b16 %v815, %v811
    %v1044 = vpack.c.b16 %v816, %v812
    %v1045 = vpack.c.b16 %v821, %v817
    %v1046 = vpack.c.b16 %v822, %v818
    %v1047 = vpack.c.b16 %v823, %v819
    %v1048 = vpack.c.b16 %v824, %v820
    %v1049 = vpack.c.b16 %v829, %v825
    %v1050 = vpack.c.b16 %v830, %v826
    %v1051 = vpack.c.b16 %v831, %v827
    %v1052 = vpack.c.b16 %v832, %v828
    %v1053 = vpack.c.b16 %v837, %v833
    %v1054 = vpack.c.b16 %v838, %v834
    %v1055 = vpack.c.b16 %v839, %v835
    %v1056 = vpack.c.b16 %v840, %v836
    %v1057 = vpack.c.b16 %v845, %v841
    %v1058 = vpack.c.b16 %v846, %v842
    %v1059 = vpack.c.b16 %v847, %v843
    %v1060 = vpack.c.b16 %v848, %v844
    %v1061 = vpack.c.b16 %v853, %v849
    %v1062 = vpack.c.b16 %v854, %v850
    %v1063 = vpack.c.b16 %v855, %v851
    %v1064 = vpack.c.b16 %v856, %v852
    %v1065 = vpack.c.b16 %v861, %v857
    %v1066 = vpack.c.b16 %v862, %v858
    %v1067 = vpack.c.b16 %v863, %v859
    %v1068 = vpack.c.b16 %v864, %v860
    %v1069 = vpack.c.b16 %v869, %v865
    %v1070 = vpack.c.b16 %v870, %v866
    %v1071 = vpack.c.b16 %v871, %v867
    %v1072 = vpack.c.b16 %v872, %v868
    %v1073 = vpack.c.b16 %v877, %v873
    %v1074 = vpack.c.b16 %v878, %v874
    %v1075 = vpack.c.b16 %v879, %v875
    %v1076 = vpack.c.b16 %v880, %v876
    %v1077 = vpack.c.b16 %v885, %v881
    %v1078 = vpack.c.b16 %v886, %v882
    %v1079 = vpack.c.b16 %v887, %v883
    %v1080 = vpack.c.b16 %v888, %v884
    %v1081 = vpack.c.b16 %v893, %v889
    %v1082 = vpack.c.b16 %v894, %v890
    %v1083 = vpack.c.b16 %v895, %v891
    %v1084 = vpack.c.b16 %v896, %v892
    %v1085 = vpack.c.b16 %v901, %v897
    %v1086 = vpack.c.b16 %v902, %v898
    %v1087 = vpack.c.b16 %v903, %v899
    %v1088 = vpack.c.b16 %v904, %v900
    %v1089 = vpack.c.b16 %v909, %v905
    %v1090 = vpack.c.b16 %v910, %v906
    %v1091 = vpack.c.b16 %v911, %v907
    %v1092 = vpack.c.b16 %v912, %v908
    %v1093 = vpack.c.b16 %v917, %v913
    %v1094 = vpack.c.b16 %v918, %v914
    %v1095 = vpack.c.b16 %v919, %v915
    %v1096 = vpack.c.b16 %v920, %v916
    %v1097 = vpack.c.b16 %v925, %v921
    %v1098 = vpack.c.b16 %v926, %v922
    %v1099 = vpack.c.b16 %v927, %v923
    %v1100 = vpack.c.b16 %v928, %v924
    %v1101 = vpack.c.b16 %v933, %v929
    %v1102 = vpack.c.b16 %v934, %v930
    %v1103 = vpack.c.b16 %v935, %v931
    %v1104 = vpack.c.b16 %v936, %v932
    %v1105 = vpack.c.b16 %v941, %v937
    %v1106 = vpack.c.b16 %v942, %v938
    %v1107 = vpack.c.b16 %v943, %v939
    %v1108 = vpack.c.b16 %v944, %v940
    %v1109 = vpack.c.b16 %v949, %v945
    %v1110 = vpack.c.b16 %v950, %v946
    %v1111 = vpack.c.b16 %v951, %v947
    %v1112 = vpack.c.b16 %v952, %v948
    %v1113 = vpack.c.b16 %v957, %v953
    %v1114 = vpack.c.b16 %v958, %v954
    %v1115 = vpack.c.b16 %v959, %v955
    %v1116 = vpack.c.b16 %v960, %v956
    %v1117 = vpack.c.b16 %v965, %v961
    %v1118 = vpack.c.b16 %v966, %v962
    %v1119 = vpack.c.b16 %v967, %v963
    %v1120 = vpack.c.b16 %v968, %v964
    %v1121 = vpack.c.b16 %v973, %v969
    %v1122 = vpack.c.b16 %v974, %v970
    %v1123 = vpack.c.b16 %v975, %v971
    %v1124 = vpack.c.b16 %v976, %v972
    %v1125 = vpack.c.b16 %v981, %v977
    %v1126 = vpack.c.b16 %v982, %v978
    %v1127 = vpack.c.b16 %v983, %v979
    %v1128 = vpack.c.b16 %v984, %v980
    %v1129 = vpack.c.b16 %v989, %v985
    %v1130 = vpack.c.b16 %v990, %v986
    %v1131 = vpack.c.b16 %v991, %v987
    %v1132 = vpack.c.b16 %v992, %v988
    %v1133 = vpack.c.b16 %v997, %v993
    %v1134 = vpack.c.b16 %v998, %v994
    %v1135 = vpack.c.b16 %v999, %v995
    %v1136 = vpack.c.b16 %v1000, %v996
    %v1137 = vpack.c.b16 %v1005, %v1001
    %v1138 = vpack.c.b16 %v1006, %v1002
    %v1139 = vpack.c.b16 %v1007, %v1003
    %v1140 = vpack.c.b16 %v1008, %v1004
    %v1141 = vpack.c.b16 %v1013, %v1009
    %v1142 = vpack.c.b16 %v1014, %v1010
    %v1143 = vpack.c.b16 %v1015, %v1011
    %v1144 = vpack.c.b16 %v1016, %v1012
    %1273 = vmatprep.subr.bf16.mxu0 %v1046
    %1274 = vmatpush1.bf16.msra.mxu0 %v1045
    %1275 = vmatprep.subr.bf16.mxu0 %v1042
    %1276 = vmatpush1.bf16.msra.mxu0 %v1041
    %1277 = vmatprep.subr.bf16.mxu0 %v1038
    %1278 = vmatpush1.bf16.msra.mxu0 %v1037
    %1279 = vmatprep.subr.bf16.mxu0 %v1034
    %1280 = vmatpush1.bf16.msra.mxu0 %v1033
    %1281 = vmatprep.subr.bf16.mxu0 %v1030
    %1282 = vmatpush1.bf16.msra.mxu0 %v1029
    %1283 = vmatprep.subr.bf16.mxu0 %v1026
    %1284 = vmatpush1.bf16.msra.mxu0 %v1025
    %1285 = vmatprep.subr.bf16.mxu0 %v1022
    %1286 = vmatpush1.bf16.msra.mxu0 %v1021
    %1287 = vmatprep.subr.bf16.mxu0 %v1018
    %1288 = vmatpush1.bf16.msra.mxu0 %v1017
    %1289 = vmatprep.subr.bf16.mxu0 %v1078
    %1290 = vmatpush2.bf16.msra.mxu0 %v1077
    %1291 = vmatprep.subr.bf16.mxu0 %v1074
    %1292 = vmatpush2.bf16.msra.mxu0 %v1073
    %1293 = vmatprep.subr.bf16.mxu0 %v1070
    %1294 = vmatpush2.bf16.msra.mxu0 %v1069
    %1295 = vmatprep.subr.bf16.mxu0 %v1066
    %1296 = vmatpush2.bf16.msra.mxu0 %v1065
    %1297 = vmatprep.subr.bf16.mxu0 %v1062
    %1298 = vmatpush2.bf16.msra.mxu0 %v1061
    %1299 = vmatprep.subr.bf16.mxu0 %v1058
    %1300 = vmatpush2.bf16.msra.mxu0 %v1057
    %1301 = vmatprep.subr.bf16.mxu0 %v1054
    %1302 = vmatpush2.bf16.msra.mxu0 %v1053
    %1303 = vmatprep.subr.bf16.mxu0 %v1050
    %1304 = vmatpush2.bf16.msra.mxu0 %v1049
    %1305 = vmatprep.mubr.bf16.mxu0 %v452
    %1306 = vmatmul.mubr.bf16.gmra.mxu0 %v451
    %v1307 = vpop.f32.mrf.mxu0
    %v1308 = vadd.f32 %v616, %v1307
    %v1309 = vpop.f32.mrf.mxu0
    %v1310 = vadd.f32 %v620, %v1309
    %v1311 = vpop.f32.mrf.mxu0
    %v1312 = vadd.f32 %v616, %v1311
    %v1313 = vpop.f32.mrf.mxu0
    %v1314 = vadd.f32 %v620, %v1313
    %1315 = vmatprep.mubr.bf16.mxu0 %v456
    %1316 = vmatmul.mubr.bf16.gmra.mxu0 %v455
    %v1317 = vpop.f32.mrf.mxu0
    %v1318 = vadd.f32 %v616, %v1317
    %v1319 = vpop.f32.mrf.mxu0
    %v1320 = vadd.f32 %v620, %v1319
    %v1321 = vpop.f32.mrf.mxu0
    %v1322 = vadd.f32 %v616, %v1321
    %v1323 = vpop.f32.mrf.mxu0
    %v1324 = vadd.f32 %v620, %v1323
    %1325 = vmatprep.mubr.bf16.mxu0 %v460
    %1326 = vmatmul.mubr.bf16.gmra.mxu0 %v459
    %v1327 = vpop.f32.mrf.mxu0
    %v1328 = vadd.f32 %v616, %v1327
    %v1329 = vpop.f32.mrf.mxu0
    %v1330 = vadd.f32 %v620, %v1329
    %v1331 = vpop.f32.mrf.mxu0
    %v1332 = vadd.f32 %v616, %v1331
    %v1333 = vpop.f32.mrf.mxu0
    %v1334 = vadd.f32 %v620, %v1333
    %1335 = vmatprep.mubr.bf16.mxu0 %v464
    %1336 = vmatmul.mubr.bf16.gmra.mxu0 %v463
    %v1337 = vpop.f32.mrf.mxu0
    %v1338 = vadd.f32 %v616, %v1337
    %v1339 = vpop.f32.mrf.mxu0
    %v1340 = vadd.f32 %v620, %v1339
    %v1341 = vpop.f32.mrf.mxu0
    %v1342 = vadd.f32 %v616, %v1341
    %v1343 = vpop.f32.mrf.mxu0
    %v1344 = vadd.f32 %v620, %v1343
    %1345 = vmatprep.mubr.bf16.mxu0 %v468
    %1346 = vmatmul.mubr.bf16.gmra.mxu0 %v467
    %v1347 = vpop.f32.mrf.mxu0
    %v1348 = vadd.f32 %v616, %v1347
    %v1349 = vpop.f32.mrf.mxu0
    %v1350 = vadd.f32 %v620, %v1349
    %v1351 = vpop.f32.mrf.mxu0
    %v1352 = vadd.f32 %v616, %v1351
    %v1353 = vpop.f32.mrf.mxu0
    %v1354 = vadd.f32 %v620, %v1353
    %1355 = vmatprep.mubr.bf16.mxu0 %v472
    %1356 = vmatmul.mubr.bf16.gmra.mxu0 %v471
    %v1357 = vpop.f32.mrf.mxu0
    %v1358 = vadd.f32 %v616, %v1357
    %v1359 = vpop.f32.mrf.mxu0
    %v1360 = vadd.f32 %v620, %v1359
    %v1361 = vpop.f32.mrf.mxu0
    %v1362 = vadd.f32 %v616, %v1361
    %v1363 = vpop.f32.mrf.mxu0
    %v1364 = vadd.f32 %v620, %v1363
    %1365 = vmatprep.mubr.bf16.mxu0 %v476
    %1366 = vmatmul.mubr.bf16.gmra.mxu0 %v475
    %v1367 = vpop.f32.mrf.mxu0
    %v1368 = vadd.f32 %v616, %v1367
    %v1369 = vpop.f32.mrf.mxu0
    %v1370 = vadd.f32 %v620, %v1369
    %v1371 = vpop.f32.mrf.mxu0
    %v1372 = vadd.f32 %v616, %v1371
    %v1373 = vpop.f32.mrf.mxu0
    %v1374 = vadd.f32 %v620, %v1373
    %1375 = vmatprep.mubr.bf16.mxu0 %v480
    %1376 = vmatmul.mubr.bf16.gmra.mxu0 %v479
    %v1377 = vpop.f32.mrf.mxu0
    %v1378 = vadd.f32 %v616, %v1377
    %v1379 = vpop.f32.mrf.mxu0
    %v1380 = vadd.f32 %v620, %v1379
    %v1381 = vpop.f32.mrf.mxu0
    %v1382 = vadd.f32 %v616, %v1381
    %v1383 = vpop.f32.mrf.mxu0
    %v1384 = vadd.f32 %v620, %v1383
    %1385 = vdwg.mxu0
    %1386 = vmatprep.subr.bf16.mxu0 %v1110
    %1387 = vmatpush1.bf16.msra.mxu0 %v1109
    %1388 = vmatprep.subr.bf16.mxu0 %v1106
    %1389 = vmatpush1.bf16.msra.mxu0 %v1105
    %1390 = vmatprep.subr.bf16.mxu0 %v1102
    %1391 = vmatpush1.bf16.msra.mxu0 %v1101
    %1392 = vmatprep.subr.bf16.mxu0 %v1098
    %1393 = vmatpush1.bf16.msra.mxu0 %v1097
    %1394 = vmatprep.subr.bf16.mxu0 %v1094
    %1395 = vmatpush1.bf16.msra.mxu0 %v1093
    %1396 = vmatprep.subr.bf16.mxu0 %v1090
    %1397 = vmatpush1.bf16.msra.mxu0 %v1089
    %1398 = vmatprep.subr.bf16.mxu0 %v1086
    %1399 = vmatpush1.bf16.msra.mxu0 %v1085
    %1400 = vmatprep.subr.bf16.mxu0 %v1082
    %1401 = vmatpush1.bf16.msra.mxu0 %v1081
    %1402 = vmatprep.subr.bf16.mxu0 %v1142
    %1403 = vmatpush2.bf16.msra.mxu0 %v1141
    %1404 = vmatprep.subr.bf16.mxu0 %v1138
    %1405 = vmatpush2.bf16.msra.mxu0 %v1137
    %1406 = vmatprep.subr.bf16.mxu0 %v1134
    %1407 = vmatpush2.bf16.msra.mxu0 %v1133
    %1408 = vmatprep.subr.bf16.mxu0 %v1130
    %1409 = vmatpush2.bf16.msra.mxu0 %v1129
    %1410 = vmatprep.subr.bf16.mxu0 %v1126
    %1411 = vmatpush2.bf16.msra.mxu0 %v1125
    %1412 = vmatprep.subr.bf16.mxu0 %v1122
    %1413 = vmatpush2.bf16.msra.mxu0 %v1121
    %1414 = vmatprep.subr.bf16.mxu0 %v1118
    %1415 = vmatpush2.bf16.msra.mxu0 %v1117
    %1416 = vmatprep.subr.bf16.mxu0 %v1114
    %1417 = vmatpush2.bf16.msra.mxu0 %v1113
    %1418 = vmatprep.mubr.bf16.mxu0 %v454
    %1419 = vmatmul.mubr.bf16.gmra.mxu0 %v453
    %v1420 = vpop.f32.mrf.mxu0
    %v1421 = vadd.f32 %v1308, %v1420
    %v1422 = vpop.f32.mrf.mxu0
    %v1423 = vadd.f32 %v1310, %v1422
    %v1424 = vpop.f32.mrf.mxu0
    %v1425 = vadd.f32 %v1312, %v1424
    %v1426 = vpop.f32.mrf.mxu0
    %v1427 = vadd.f32 %v1314, %v1426
    %1428 = vmatprep.mubr.bf16.mxu0 %v458
    %1429 = vmatmul.mubr.bf16.gmra.mxu0 %v457
    %v1430 = vpop.f32.mrf.mxu0
    %v1431 = vadd.f32 %v1318, %v1430
    %v1432 = vpop.f32.mrf.mxu0
    %v1433 = vadd.f32 %v1320, %v1432
    %v1434 = vpop.f32.mrf.mxu0
    %v1435 = vadd.f32 %v1322, %v1434
    %v1436 = vpop.f32.mrf.mxu0
    %v1437 = vadd.f32 %v1324, %v1436
    %1438 = vmatprep.mubr.bf16.mxu0 %v462
    %1439 = vmatmul.mubr.bf16.gmra.mxu0 %v461
    %v1440 = vpop.f32.mrf.mxu0
    %v1441 = vadd.f32 %v1328, %v1440
    %v1442 = vpop.f32.mrf.mxu0
    %v1443 = vadd.f32 %v1330, %v1442
    %v1444 = vpop.f32.mrf.mxu0
    %v1445 = vadd.f32 %v1332, %v1444
    %v1446 = vpop.f32.mrf.mxu0
    %v1447 = vadd.f32 %v1334, %v1446
    %1448 = vmatprep.mubr.bf16.mxu0 %v466
    %1449 = vmatmul.mubr.bf16.gmra.mxu0 %v465
    %v1450 = vpop.f32.mrf.mxu0
    %v1451 = vadd.f32 %v1338, %v1450
    %v1452 = vpop.f32.mrf.mxu0
    %v1453 = vadd.f32 %v1340, %v1452
    %v1454 = vpop.f32.mrf.mxu0
    %v1455 = vadd.f32 %v1342, %v1454
    %v1456 = vpop.f32.mrf.mxu0
    %v1457 = vadd.f32 %v1344, %v1456
    %1458 = vmatprep.mubr.bf16.mxu0 %v470
    %1459 = vmatmul.mubr.bf16.gmra.mxu0 %v469
    %v1460 = vpop.f32.mrf.mxu0
    %v1461 = vadd.f32 %v1348, %v1460
    %v1462 = vpop.f32.mrf.mxu0
    %v1463 = vadd.f32 %v1350, %v1462
    %v1464 = vpop.f32.mrf.mxu0
    %v1465 = vadd.f32 %v1352, %v1464
    %v1466 = vpop.f32.mrf.mxu0
    %v1467 = vadd.f32 %v1354, %v1466
    %1468 = vmatprep.mubr.bf16.mxu0 %v474
    %1469 = vmatmul.mubr.bf16.gmra.mxu0 %v473
    %v1470 = vpop.f32.mrf.mxu0
    %v1471 = vadd.f32 %v1358, %v1470
    %v1472 = vpop.f32.mrf.mxu0
    %v1473 = vadd.f32 %v1360, %v1472
    %v1474 = vpop.f32.mrf.mxu0
    %v1475 = vadd.f32 %v1362, %v1474
    %v1476 = vpop.f32.mrf.mxu0
    %v1477 = vadd.f32 %v1364, %v1476
    %1478 = vmatprep.mubr.bf16.mxu0 %v478
    %1479 = vmatmul.mubr.bf16.gmra.mxu0 %v477
    %v1480 = vpop.f32.mrf.mxu0
    %v1481 = vadd.f32 %v1368, %v1480
    %v1482 = vpop.f32.mrf.mxu0
    %v1483 = vadd.f32 %v1370, %v1482
    %v1484 = vpop.f32.mrf.mxu0
    %v1485 = vadd.f32 %v1372, %v1484
    %v1486 = vpop.f32.mrf.mxu0
    %v1487 = vadd.f32 %v1374, %v1486
    %1488 = vmatprep.mubr.bf16.mxu0 %v482
    %1489 = vmatmul.mubr.bf16.gmra.mxu0 %v481
    %v1490 = vpop.f32.mrf.mxu0
    %v1491 = vadd.f32 %v1378, %v1490
    %v1492 = vpop.f32.mrf.mxu0
    %v1493 = vadd.f32 %v1380, %v1492
    %v1494 = vpop.f32.mrf.mxu0
    %v1495 = vadd.f32 %v1382, %v1494
    %v1496 = vpop.f32.mrf.mxu0
    %v1497 = vadd.f32 %v1384, %v1496
    %1498 = vdwg.mxu0
    %1499 = vmatprep.subr.bf16.mxu0 %v1048
    %1500 = vmatpush1.bf16.msra.mxu0 %v1047
    %1501 = vmatprep.subr.bf16.mxu0 %v1044
    %1502 = vmatpush1.bf16.msra.mxu0 %v1043
    %1503 = vmatprep.subr.bf16.mxu0 %v1040
    %1504 = vmatpush1.bf16.msra.mxu0 %v1039
    %1505 = vmatprep.subr.bf16.mxu0 %v1036
    %1506 = vmatpush1.bf16.msra.mxu0 %v1035
    %1507 = vmatprep.subr.bf16.mxu0 %v1032
    %1508 = vmatpush1.bf16.msra.mxu0 %v1031
    %1509 = vmatprep.subr.bf16.mxu0 %v1028
    %1510 = vmatpush1.bf16.msra.mxu0 %v1027
    %1511 = vmatprep.subr.bf16.mxu0 %v1024
    %1512 = vmatpush1.bf16.msra.mxu0 %v1023
    %1513 = vmatprep.subr.bf16.mxu0 %v1020
    %1514 = vmatpush1.bf16.msra.mxu0 %v1019
    %1515 = vmatprep.subr.bf16.mxu0 %v1080
    %1516 = vmatpush2.bf16.msra.mxu0 %v1079
    %1517 = vmatprep.subr.bf16.mxu0 %v1076
    %1518 = vmatpush2.bf16.msra.mxu0 %v1075
    %1519 = vmatprep.subr.bf16.mxu0 %v1072
    %1520 = vmatpush2.bf16.msra.mxu0 %v1071
    %1521 = vmatprep.subr.bf16.mxu0 %v1068
    %1522 = vmatpush2.bf16.msra.mxu0 %v1067
    %1523 = vmatprep.subr.bf16.mxu0 %v1064
    %1524 = vmatpush2.bf16.msra.mxu0 %v1063
    %1525 = vmatprep.subr.bf16.mxu0 %v1060
    %1526 = vmatpush2.bf16.msra.mxu0 %v1059
    %1527 = vmatprep.subr.bf16.mxu0 %v1056
    %1528 = vmatpush2.bf16.msra.mxu0 %v1055
    %1529 = vmatprep.subr.bf16.mxu0 %v1052
    %1530 = vmatpush2.bf16.msra.mxu0 %v1051
    %1531 = vmatprep.mubr.bf16.mxu0 %v452
    %1532 = vmatmul.mubr.bf16.gmra.mxu0 %v451
    %v1533 = vpop.f32.mrf.mxu0
    %v1534 = vadd.f32 %v624, %v1533
    %v1535 = vpop.f32.mrf.mxu0
    %v1536 = vadd.f32 %v628, %v1535
    %v1537 = vpop.f32.mrf.mxu0
    %v1538 = vadd.f32 %v624, %v1537
    %v1539 = vpop.f32.mrf.mxu0
    %v1540 = vadd.f32 %v628, %v1539
    %1541 = vmatprep.mubr.bf16.mxu0 %v456
    %1542 = vmatmul.mubr.bf16.gmra.mxu0 %v455
    %v1543 = vpop.f32.mrf.mxu0
    %v1544 = vadd.f32 %v624, %v1543
    %v1545 = vpop.f32.mrf.mxu0
    %v1546 = vadd.f32 %v628, %v1545
    %v1547 = vpop.f32.mrf.mxu0
    %v1548 = vadd.f32 %v624, %v1547
    %v1549 = vpop.f32.mrf.mxu0
    %v1550 = vadd.f32 %v628, %v1549
    %1551 = vmatprep.mubr.bf16.mxu0 %v460
    %1552 = vmatmul.mubr.bf16.gmra.mxu0 %v459
    %v1553 = vpop.f32.mrf.mxu0
    %v1554 = vadd.f32 %v624, %v1553
    %v1555 = vpop.f32.mrf.mxu0
    %v1556 = vadd.f32 %v628, %v1555
    %v1557 = vpop.f32.mrf.mxu0
    %v1558 = vadd.f32 %v624, %v1557
    %v1559 = vpop.f32.mrf.mxu0
    %v1560 = vadd.f32 %v628, %v1559
    %1561 = vmatprep.mubr.bf16.mxu0 %v464
    %1562 = vmatmul.mubr.bf16.gmra.mxu0 %v463
    %v1563 = vpop.f32.mrf.mxu0
    %v1564 = vadd.f32 %v624, %v1563
    %v1565 = vpop.f32.mrf.mxu0
    %v1566 = vadd.f32 %v628, %v1565
    %v1567 = vpop.f32.mrf.mxu0
    %v1568 = vadd.f32 %v624, %v1567
    %v1569 = vpop.f32.mrf.mxu0
    %v1570 = vadd.f32 %v628, %v1569
    %1571 = vmatprep.mubr.bf16.mxu0 %v468
    %1572 = vmatmul.mubr.bf16.gmra.mxu0 %v467
    %v1573 = vpop.f32.mrf.mxu0
    %v1574 = vadd.f32 %v624, %v1573
    %v1575 = vpop.f32.mrf.mxu0
    %v1576 = vadd.f32 %v628, %v1575
    %v1577 = vpop.f32.mrf.mxu0
    %v1578 = vadd.f32 %v624, %v1577
    %v1579 = vpop.f32.mrf.mxu0
    %v1580 = vadd.f32 %v628, %v1579
    %1581 = vmatprep.mubr.bf16.mxu0 %v472
    %1582 = vmatmul.mubr.bf16.gmra.mxu0 %v471
    %v1583 = vpop.f32.mrf.mxu0
    %v1584 = vadd.f32 %v624, %v1583
    %v1585 = vpop.f32.mrf.mxu0
    %v1586 = vadd.f32 %v628, %v1585
    %v1587 = vpop.f32.mrf.mxu0
    %v1588 = vadd.f32 %v624, %v1587
    %v1589 = vpop.f32.mrf.mxu0
    %v1590 = vadd.f32 %v628, %v1589
    %1591 = vmatprep.mubr.bf16.mxu0 %v476
    %1592 = vmatmul.mubr.bf16.gmra.mxu0 %v475
    %v1593 = vpop.f32.mrf.mxu0
    %v1594 = vadd.f32 %v624, %v1593
    %v1595 = vpop.f32.mrf.mxu0
    %v1596 = vadd.f32 %v628, %v1595
    %v1597 = vpop.f32.mrf.mxu0
    %v1598 = vadd.f32 %v624, %v1597
    %v1599 = vpop.f32.mrf.mxu0
    %v1600 = vadd.f32 %v628, %v1599
    %1601 = vmatprep.mubr.bf16.mxu0 %v480
    %1602 = vmatmul.mubr.bf16.gmra.mxu0 %v479
    %v1603 = vpop.f32.mrf.mxu0
    %v1604 = vadd.f32 %v624, %v1603
    %v1605 = vpop.f32.mrf.mxu0
    %v1606 = vadd.f32 %v628, %v1605
    %v1607 = vpop.f32.mrf.mxu0
    %v1608 = vadd.f32 %v624, %v1607
    %v1609 = vpop.f32.mrf.mxu0
    %v1610 = vadd.f32 %v628, %v1609
    %1611 = vdwg.mxu0
    %1612 = vmatprep.subr.bf16.mxu0 %v1112
    %1613 = vmatpush1.bf16.msra.mxu0 %v1111
    %1614 = vmatprep.subr.bf16.mxu0 %v1108
    %1615 = vmatpush1.bf16.msra.mxu0 %v1107
    %1616 = vmatprep.subr.bf16.mxu0 %v1104
    %1617 = vmatpush1.bf16.msra.mxu0 %v1103
    %1618 = vmatprep.subr.bf16.mxu0 %v1100
    %1619 = vmatpush1.bf16.msra.mxu0 %v1099
    %1620 = vmatprep.subr.bf16.mxu0 %v1096
    %1621 = vmatpush1.bf16.msra.mxu0 %v1095
    %1622 = vmatprep.subr.bf16.mxu0 %v1092
    %1623 = vmatpush1.bf16.msra.mxu0 %v1091
    %1624 = vmatprep.subr.bf16.mxu0 %v1088
    %1625 = vmatpush1.bf16.msra.mxu0 %v1087
    %1626 = vmatprep.subr.bf16.mxu0 %v1084
    %1627 = vmatpush1.bf16.msra.mxu0 %v1083
    %1628 = vmatprep.subr.bf16.mxu0 %v1144
    %1629 = vmatpush2.bf16.msra.mxu0 %v1143
    %1630 = vmatprep.subr.bf16.mxu0 %v1140
    %1631 = vmatpush2.bf16.msra.mxu0 %v1139
    %1632 = vmatprep.subr.bf16.mxu0 %v1136
    %1633 = vmatpush2.bf16.msra.mxu0 %v1135
    %1634 = vmatprep.subr.bf16.mxu0 %v1132
    %1635 = vmatpush2.bf16.msra.mxu0 %v1131
    %1636 = vmatprep.subr.bf16.mxu0 %v1128
    %1637 = vmatpush2.bf16.msra.mxu0 %v1127
    %1638 = vmatprep.subr.bf16.mxu0 %v1124
    %1639 = vmatpush2.bf16.msra.mxu0 %v1123
    %1640 = vmatprep.subr.bf16.mxu0 %v1120
    %1641 = vmatpush2.bf16.msra.mxu0 %v1119
    %1642 = vmatprep.subr.bf16.mxu0 %v1116
    %1643 = vmatpush2.bf16.msra.mxu0 %v1115
    %1644 = vmatprep.mubr.bf16.mxu0 %v454
    %1645 = vmatmul.mubr.bf16.gmra.mxu0 %v453
    %v1646 = vpop.f32.mrf.mxu0
    %v1647 = vadd.f32 %v1534, %v1646
    %v1648 = vpop.f32.mrf.mxu0
    %v1649 = vadd.f32 %v1536, %v1648
    %v1650 = vpop.f32.mrf.mxu0
    %v1651 = vadd.f32 %v1538, %v1650
    %v1652 = vpop.f32.mrf.mxu0
    %v1653 = vadd.f32 %v1540, %v1652
    %1654 = vmatprep.mubr.bf16.mxu0 %v458
    %1655 = vmatmul.mubr.bf16.gmra.mxu0 %v457
    %v1656 = vpop.f32.mrf.mxu0
    %v1657 = vadd.f32 %v1544, %v1656
    %v1658 = vpop.f32.mrf.mxu0
    %v1659 = vadd.f32 %v1546, %v1658
    %v1660 = vpop.f32.mrf.mxu0
    %v1661 = vadd.f32 %v1548, %v1660
    %v1662 = vpop.f32.mrf.mxu0
    %v1663 = vadd.f32 %v1550, %v1662
    %1664 = vmatprep.mubr.bf16.mxu0 %v462
    %1665 = vmatmul.mubr.bf16.gmra.mxu0 %v461
    %v1666 = vpop.f32.mrf.mxu0
    %v1667 = vadd.f32 %v1554, %v1666
    %v1668 = vpop.f32.mrf.mxu0
    %v1669 = vadd.f32 %v1556, %v1668
    %v1670 = vpop.f32.mrf.mxu0
    %v1671 = vadd.f32 %v1558, %v1670
    %v1672 = vpop.f32.mrf.mxu0
    %v1673 = vadd.f32 %v1560, %v1672
    %1674 = vmatprep.mubr.bf16.mxu0 %v466
    %1675 = vmatmul.mubr.bf16.gmra.mxu0 %v465
    %v1676 = vpop.f32.mrf.mxu0
    %v1677 = vadd.f32 %v1564, %v1676
    %v1678 = vpop.f32.mrf.mxu0
    %v1679 = vadd.f32 %v1566, %v1678
    %v1680 = vpop.f32.mrf.mxu0
    %v1681 = vadd.f32 %v1568, %v1680
    %v1682 = vpop.f32.mrf.mxu0
    %v1683 = vadd.f32 %v1570, %v1682
    %1684 = vmatprep.mubr.bf16.mxu0 %v470
    %1685 = vmatmul.mubr.bf16.gmra.mxu0 %v469
    %v1686 = vpop.f32.mrf.mxu0
    %v1687 = vadd.f32 %v1574, %v1686
    %v1688 = vpop.f32.mrf.mxu0
    %v1689 = vadd.f32 %v1576, %v1688
    %v1690 = vpop.f32.mrf.mxu0
    %v1691 = vadd.f32 %v1578, %v1690
    %v1692 = vpop.f32.mrf.mxu0
    %v1693 = vadd.f32 %v1580, %v1692
    %1694 = vmatprep.mubr.bf16.mxu0 %v474
    %1695 = vmatmul.mubr.bf16.gmra.mxu0 %v473
    %v1696 = vpop.f32.mrf.mxu0
    %v1697 = vadd.f32 %v1584, %v1696
    %v1698 = vpop.f32.mrf.mxu0
    %v1699 = vadd.f32 %v1586, %v1698
    %v1700 = vpop.f32.mrf.mxu0
    %v1701 = vadd.f32 %v1588, %v1700
    %v1702 = vpop.f32.mrf.mxu0
    %v1703 = vadd.f32 %v1590, %v1702
    %1704 = vmatprep.mubr.bf16.mxu0 %v478
    %1705 = vmatmul.mubr.bf16.gmra.mxu0 %v477
    %v1706 = vpop.f32.mrf.mxu0
    %v1707 = vadd.f32 %v1594, %v1706
    %v1708 = vpop.f32.mrf.mxu0
    %v1709 = vadd.f32 %v1596, %v1708
    %v1710 = vpop.f32.mrf.mxu0
    %v1711 = vadd.f32 %v1598, %v1710
    %v1712 = vpop.f32.mrf.mxu0
    %v1713 = vadd.f32 %v1600, %v1712
    %1714 = vmatprep.mubr.bf16.mxu0 %v482
    %1715 = vmatmul.mubr.bf16.gmra.mxu0 %v481
    %v1716 = vpop.f32.mrf.mxu0
    %v1717 = vadd.f32 %v1604, %v1716
    %v1718 = vpop.f32.mrf.mxu0
    %v1719 = vadd.f32 %v1606, %v1718
    %v1720 = vpop.f32.mrf.mxu0
    %v1721 = vadd.f32 %v1608, %v1720
    %v1722 = vpop.f32.mrf.mxu0
    %v1723 = vadd.f32 %v1610, %v1722
    %1724 = vdwg.mxu0
    %v1725 = vmax.f32 %v1421, 0.0
    %v1726 = vmax.f32 %v1423, 0.0
    %v1727 = vmax.f32 %v1647, 0.0
    %v1728 = vmax.f32 %v1649, 0.0
    %v1729 = vmax.f32 %v1425, 0.0
    %v1730 = vmax.f32 %v1427, 0.0
    %v1731 = vmax.f32 %v1651, 0.0
    %v1732 = vmax.f32 %v1653, 0.0
    %v1733 = vmax.f32 %v1431, 0.0
    %v1734 = vmax.f32 %v1433, 0.0
    %v1735 = vmax.f32 %v1657, 0.0
    %v1736 = vmax.f32 %v1659, 0.0
    %v1737 = vmax.f32 %v1435, 0.0
    %v1738 = vmax.f32 %v1437, 0.0
    %v1739 = vmax.f32 %v1661, 0.0
    %v1740 = vmax.f32 %v1663, 0.0
    %v1741 = vmax.f32 %v1441, 0.0
    %v1742 = vmax.f32 %v1443, 0.0
    %v1743 = vmax.f32 %v1667, 0.0
    %v1744 = vmax.f32 %v1669, 0.0
    %v1745 = vmax.f32 %v1445, 0.0
    %v1746 = vmax.f32 %v1447, 0.0
    %v1747 = vmax.f32 %v1671, 0.0
    %v1748 = vmax.f32 %v1673, 0.0
    %v1749 = vmax.f32 %v1451, 0.0
    %v1750 = vmax.f32 %v1453, 0.0
    %v1751 = vmax.f32 %v1677, 0.0
    %v1752 = vmax.f32 %v1679, 0.0
    %v1753 = vmax.f32 %v1455, 0.0
    %v1754 = vmax.f32 %v1457, 0.0
    %v1755 = vmax.f32 %v1681, 0.0
    %v1756 = vmax.f32 %v1683, 0.0
    %v1757 = vmax.f32 %v1461, 0.0
    %v1758 = vmax.f32 %v1463, 0.0
    %v1759 = vmax.f32 %v1687, 0.0
    %v1760 = vmax.f32 %v1689, 0.0
    %v1761 = vmax.f32 %v1465, 0.0
    %v1762 = vmax.f32 %v1467, 0.0
    %v1763 = vmax.f32 %v1691, 0.0
    %v1764 = vmax.f32 %v1693, 0.0
    %v1765 = vmax.f32 %v1471, 0.0
    %v1766 = vmax.f32 %v1473, 0.0
    %v1767 = vmax.f32 %v1697, 0.0
    %v1768 = vmax.f32 %v1699, 0.0
    %v1769 = vmax.f32 %v1475, 0.0
    %v1770 = vmax.f32 %v1477, 0.0
    %v1771 = vmax.f32 %v1701, 0.0
    %v1772 = vmax.f32 %v1703, 0.0
    %v1773 = vmax.f32 %v1481, 0.0
    %v1774 = vmax.f32 %v1483, 0.0
    %v1775 = vmax.f32 %v1707, 0.0
    %v1776 = vmax.f32 %v1709, 0.0
    %v1777 = vmax.f32 %v1485, 0.0
    %v1778 = vmax.f32 %v1487, 0.0
    %v1779 = vmax.f32 %v1711, 0.0
    %v1780 = vmax.f32 %v1713, 0.0
    %v1781 = vmax.f32 %v1491, 0.0
    %v1782 = vmax.f32 %v1493, 0.0
    %v1783 = vmax.f32 %v1717, 0.0
    %v1784 = vmax.f32 %v1719, 0.0
    %v1785 = vmax.f32 %v1495, 0.0
    %v1786 = vmax.f32 %v1497, 0.0
    %v1787 = vmax.f32 %v1721, 0.0
    %v1788 = vmax.f32 %v1723, 0.0
    %v1789 = vpack.c.bf16 %v1729, %v1725
    %v1790 = vpack.c.bf16 %v1730, %v1726
    %v1791 = vpack.c.bf16 %v1731, %v1727
    %v1792 = vpack.c.bf16 %v1732, %v1728
    %v1793 = vpack.c.bf16 %v1737, %v1733
    %v1794 = vpack.c.bf16 %v1738, %v1734
    %v1795 = vpack.c.bf16 %v1739, %v1735
    %v1796 = vpack.c.bf16 %v1740, %v1736
    %v1797 = vpack.c.bf16 %v1745, %v1741
    %v1798 = vpack.c.bf16 %v1746, %v1742
    %v1799 = vpack.c.bf16 %v1747, %v1743
    %v1800 = vpack.c.bf16 %v1748, %v1744
    %v1801 = vpack.c.bf16 %v1753, %v1749
    %v1802 = vpack.c.bf16 %v1754, %v1750
    %v1803 = vpack.c.bf16 %v1755, %v1751
    %v1804 = vpack.c.bf16 %v1756, %v1752
    %v1805 = vpack.c.bf16 %v1761, %v1757
    %v1806 = vpack.c.bf16 %v1762, %v1758
    %v1807 = vpack.c.bf16 %v1763, %v1759
    %v1808 = vpack.c.bf16 %v1764, %v1760
    %v1809 = vpack.c.bf16 %v1769, %v1765
    %v1810 = vpack.c.bf16 %v1770, %v1766
    %v1811 = vpack.c.bf16 %v1771, %v1767
    %v1812 = vpack.c.bf16 %v1772, %v1768
    %v1813 = vpack.c.bf16 %v1777, %v1773
    %v1814 = vpack.c.bf16 %v1778, %v1774
    %v1815 = vpack.c.bf16 %v1779, %v1775
    %v1816 = vpack.c.bf16 %v1780, %v1776
    %v1817 = vpack.c.bf16 %v1785, %v1781
    %v1818 = vpack.c.bf16 %v1786, %v1782
    %v1819 = vpack.c.bf16 %v1787, %v1783
    %v1820 = vpack.c.bf16 %v1788, %v1784
    %v1821 = vld [vmem:[%s5] sm:$0xf]
    %v1822 = vld [vmem:[%s5 + $0x4] sm:$0xf]
    %v1823 = vld [vmem:[%s5 + $0x8] sm:$0xf]
    %v1824 = vld [vmem:[%s5 + $0xc] sm:$0xf]
    %v1825 = vld [vmem:[%s5 + $0x10] sm:$0xf]
    %v1826 = vld [vmem:[%s5 + $0x14] sm:$0xf]
    %v1827 = vld [vmem:[%s5 + $0x18] sm:$0xf]
    %v1828 = vld [vmem:[%s5 + $0x1c] sm:$0xf]
    %v1829 = vld [vmem:[%s5 + $0x20] sm:$0xf]
    %v1830 = vld [vmem:[%s5 + $0x24] sm:$0xf]
    %v1831 = vld [vmem:[%s5 + $0x28] sm:$0xf]
    %v1832 = vld [vmem:[%s5 + $0x2c] sm:$0xf]
    %v1833 = vld [vmem:[%s5 + $0x30] sm:$0xf]
    %v1834 = vld [vmem:[%s5 + $0x34] sm:$0xf]
    %v1835 = vld [vmem:[%s5 + $0x38] sm:$0xf]
    %v1836 = vld [vmem:[%s5 + $0x3c] sm:$0xf]
    %v1837 = vld [vmem:[%s5 + $0x40] sm:$0xf]
    %v1838 = vld [vmem:[%s5 + $0x44] sm:$0xf]
    %v1839 = vld [vmem:[%s5 + $0x48] sm:$0xf]
    %v1840 = vld [vmem:[%s5 + $0x4c] sm:$0xf]
    %v1841 = vld [vmem:[%s5 + $0x50] sm:$0xf]
    %v1842 = vld [vmem:[%s5 + $0x54] sm:$0xf]
    %v1843 = vld [vmem:[%s5 + $0x58] sm:$0xf]
    %v1844 = vld [vmem:[%s5 + $0x5c] sm:$0xf]
    %v1845 = vld [vmem:[%s5 + $0x60] sm:$0xf]
    %v1846 = vld [vmem:[%s5 + $0x64] sm:$0xf]
    %v1847 = vld [vmem:[%s5 + $0x68] sm:$0xf]
    %v1848 = vld [vmem:[%s5 + $0x6c] sm:$0xf]
    %v1849 = vld [vmem:[%s5 + $0x70] sm:$0xf]
    %v1850 = vld [vmem:[%s5 + $0x74] sm:$0xf]
    %v1851 = vld [vmem:[%s5 + $0x78] sm:$0xf]
    %v1852 = vld [vmem:[%s5 + $0x7c] sm:$0xf]
    %v1853 = vld [vmem:[%s5 + $0x80] sm:$0xf]
    %v1854 = vld [vmem:[%s5 + $0x84] sm:$0xf]
    %v1855 = vld [vmem:[%s5 + $0x88] sm:$0xf]
    %v1856 = vld [vmem:[%s5 + $0x8c] sm:$0xf]
    %v1857 = vld [vmem:[%s5 + $0x90] sm:$0xf]
    %v1858 = vld [vmem:[%s5 + $0x94] sm:$0xf]
    %v1859 = vld [vmem:[%s5 + $0x98] sm:$0xf]
    %v1860 = vld [vmem:[%s5 + $0x9c] sm:$0xf]
    %v1861 = vld [vmem:[%s5 + $0xa0] sm:$0xf]
    %v1862 = vld [vmem:[%s5 + $0xa4] sm:$0xf]
    %v1863 = vld [vmem:[%s5 + $0xa8] sm:$0xf]
    %v1864 = vld [vmem:[%s5 + $0xac] sm:$0xf]
    %v1865 = vld [vmem:[%s5 + $0xb0] sm:$0xf]
    %v1866 = vld [vmem:[%s5 + $0xb4] sm:$0xf]
    %v1867 = vld [vmem:[%s5 + $0xb8] sm:$0xf]
    %v1868 = vld [vmem:[%s5 + $0xbc] sm:$0xf]
    %v1869 = vld [vmem:[%s5 + $0xc0] sm:$0xf]
    %v1870 = vld [vmem:[%s5 + $0xc4] sm:$0xf]
    %v1871 = vld [vmem:[%s5 + $0xc8] sm:$0xf]
    %v1872 = vld [vmem:[%s5 + $0xcc] sm:$0xf]
    %v1873 = vld [vmem:[%s5 + $0xd0] sm:$0xf]
    %v1874 = vld [vmem:[%s5 + $0xd4] sm:$0xf]
    %v1875 = vld [vmem:[%s5 + $0xd8] sm:$0xf]
    %v1876 = vld [vmem:[%s5 + $0xdc] sm:$0xf]
    %v1877 = vld [vmem:[%s5 + $0xe0] sm:$0xf]
    %v1878 = vld [vmem:[%s5 + $0xe4] sm:$0xf]
    %v1879 = vld [vmem:[%s5 + $0xe8] sm:$0xf]
    %v1880 = vld [vmem:[%s5 + $0xec] sm:$0xf]
    %v1881 = vld [vmem:[%s5 + $0xf0] sm:$0xf]
    %v1882 = vld [vmem:[%s5 + $0xf4] sm:$0xf]
    %v1883 = vld [vmem:[%s5 + $0xf8] sm:$0xf]
    %v1884 = vld [vmem:[%s5 + $0xfc] sm:$0xf]
    %s1885 = sld [smem:[#allocation2]]
    %v1886 = vstv %s1885
    %v1951 = vunpack.c.l.b16 %v1821
    %v1952 = vunpack.c.l.b16 %v1822
    %v1953 = vunpack.c.l.b16 %v1823
    %v1954 = vunpack.c.l.b16 %v1824
    %v1955 = vunpack.c.l.b16 %v1825
    %v1956 = vunpack.c.l.b16 %v1826
    %v1957 = vunpack.c.l.b16 %v1827
    %v1958 = vunpack.c.l.b16 %v1828
    %v1959 = vunpack.c.l.b16 %v1829
    %v1960 = vunpack.c.l.b16 %v1830
    %v1961 = vunpack.c.l.b16 %v1831
    %v1962 = vunpack.c.l.b16 %v1832
    %v1963 = vunpack.c.l.b16 %v1833
    %v1964 = vunpack.c.l.b16 %v1834
    %v1965 = vunpack.c.l.b16 %v1835
    %v1966 = vunpack.c.l.b16 %v1836
    %v1967 = vunpack.c.l.b16 %v1837
    %v1968 = vunpack.c.l.b16 %v1838
    %v1969 = vunpack.c.l.b16 %v1839
    %v1970 = vunpack.c.l.b16 %v1840
    %v1971 = vunpack.c.l.b16 %v1841
    %v1972 = vunpack.c.l.b16 %v1842
    %v1973 = vunpack.c.l.b16 %v1843
    %v1974 = vunpack.c.l.b16 %v1844
    %v1975 = vunpack.c.l.b16 %v1845
    %v1976 = vunpack.c.l.b16 %v1846
    %v1977 = vunpack.c.l.b16 %v1847
    %v1978 = vunpack.c.l.b16 %v1848
    %v1979 = vunpack.c.l.b16 %v1849
    %v1980 = vunpack.c.l.b16 %v1850
    %v1981 = vunpack.c.l.b16 %v1851
    %v1982 = vunpack.c.l.b16 %v1852
    %v1983 = vunpack.c.l.b16 %v1853
    %v1984 = vunpack.c.l.b16 %v1854
    %v1985 = vunpack.c.l.b16 %v1855
    %v1986 = vunpack.c.l.b16 %v1856
    %v1987 = vunpack.c.l.b16 %v1857
    %v1988 = vunpack.c.l.b16 %v1858
    %v1989 = vunpack.c.l.b16 %v1859
    %v1990 = vunpack.c.l.b16 %v1860
    %v1991 = vunpack.c.l.b16 %v1861
    %v1992 = vunpack.c.l.b16 %v1862
    %v1993 = vunpack.c.l.b16 %v1863
    %v1994 = vunpack.c.l.b16 %v1864
    %v1995 = vunpack.c.l.b16 %v1865
    %v1996 = vunpack.c.l.b16 %v1866
    %v1997 = vunpack.c.l.b16 %v1867
    %v1998 = vunpack.c.l.b16 %v1868
    %v1999 = vunpack.c.l.b16 %v1869
    %v2000 = vunpack.c.l.b16 %v1870
    %v2001 = vunpack.c.l.b16 %v1871
    %v2002 = vunpack.c.l.b16 %v1872
    %v2003 = vunpack.c.l.b16 %v1873
    %v2004 = vunpack.c.l.b16 %v1874
    %v2005 = vunpack.c.l.b16 %v1875
    %v2006 = vunpack.c.l.b16 %v1876
    %v2007 = vunpack.c.l.b16 %v1877
    %v2008 = vunpack.c.l.b16 %v1878
    %v2009 = vunpack.c.l.b16 %v1879
    %v2010 = vunpack.c.l.b16 %v1880
    %v2011 = vunpack.c.l.b16 %v1881
    %v2012 = vunpack.c.l.b16 %v1882
    %v2013 = vunpack.c.l.b16 %v1883
    %v2014 = vunpack.c.l.b16 %v1884
    %v2015 = vpack.c.b16 %v1952, %v1951
    %v2016 = vpack.c.b16 %v1954, %v1953
    %v2017 = vpack.c.b16 %v1956, %v1955
    %v2018 = vpack.c.b16 %v1958, %v1957
    %v2019 = vpack.c.b16 %v1960, %v1959
    %v2020 = vpack.c.b16 %v1962, %v1961
    %v2021 = vpack.c.b16 %v1964, %v1963
    %v2022 = vpack.c.b16 %v1966, %v1965
    %v2023 = vpack.c.b16 %v1968, %v1967
    %v2024 = vpack.c.b16 %v1970, %v1969
    %v2025 = vpack.c.b16 %v1972, %v1971
    %v2026 = vpack.c.b16 %v1974, %v1973
    %v2027 = vpack.c.b16 %v1976, %v1975
    %v2028 = vpack.c.b16 %v1978, %v1977
    %v2029 = vpack.c.b16 %v1980, %v1979
    %v2030 = vpack.c.b16 %v1982, %v1981
    %v2031 = vpack.c.b16 %v1984, %v1983
    %v2032 = vpack.c.b16 %v1986, %v1985
    %v2033 = vpack.c.b16 %v1988, %v1987
    %v2034 = vpack.c.b16 %v1990, %v1989
    %v2035 = vpack.c.b16 %v1992, %v1991
    %v2036 = vpack.c.b16 %v1994, %v1993
    %v2037 = vpack.c.b16 %v1996, %v1995
    %v2038 = vpack.c.b16 %v1998, %v1997
    %v2039 = vpack.c.b16 %v2000, %v1999
    %v2040 = vpack.c.b16 %v2002, %v2001
    %v2041 = vpack.c.b16 %v2004, %v2003
    %v2042 = vpack.c.b16 %v2006, %v2005
    %v2043 = vpack.c.b16 %v2008, %v2007
    %v2044 = vpack.c.b16 %v2010, %v2009
    %v2045 = vpack.c.b16 %v2012, %v2011
    %v2046 = vpack.c.b16 %v2014, %v2013
    %2079 = vmatprep.subr.bf16.mxu0 0
    %2080 = vmatpush1.bf16.msra.mxu0 %v2022
    %2081 = vmatprep.subr.bf16.mxu0 0
    %2082 = vmatpush1.bf16.msra.mxu0 %v2021
    %2083 = vmatprep.subr.bf16.mxu0 0
    %2084 = vmatpush1.bf16.msra.mxu0 %v2020
    %2085 = vmatprep.subr.bf16.mxu0 0
    %2086 = vmatpush1.bf16.msra.mxu0 %v2019
    %2087 = vmatprep.subr.bf16.mxu0 0
    %2088 = vmatpush1.bf16.msra.mxu0 %v2018
    %2089 = vmatprep.subr.bf16.mxu0 0
    %2090 = vmatpush1.bf16.msra.mxu0 %v2017
    %2091 = vmatprep.subr.bf16.mxu0 0
    %2092 = vmatpush1.bf16.msra.mxu0 %v2016
    %2093 = vmatprep.subr.bf16.mxu0 0
    %2094 = vmatpush1.bf16.msra.mxu0 %v2015
    %2095 = vmatprep.subr.bf16.mxu0 0
    %2096 = vmatpush2.bf16.msra.mxu0 %v2030
    %2097 = vmatprep.subr.bf16.mxu0 0
    %2098 = vmatpush2.bf16.msra.mxu0 %v2029
    %2099 = vmatprep.subr.bf16.mxu0 0
    %2100 = vmatpush2.bf16.msra.mxu0 %v2028
    %2101 = vmatprep.subr.bf16.mxu0 0
    %2102 = vmatpush2.bf16.msra.mxu0 %v2027
    %2103 = vmatprep.subr.bf16.mxu0 0
    %2104 = vmatpush2.bf16.msra.mxu0 %v2026
    %2105 = vmatprep.subr.bf16.mxu0 0
    %2106 = vmatpush2.bf16.msra.mxu0 %v2025
    %2107 = vmatprep.subr.bf16.mxu0 0
    %2108 = vmatpush2.bf16.msra.mxu0 %v2024
    %2109 = vmatprep.subr.bf16.mxu0 0
    %2110 = vmatpush2.bf16.msra.mxu0 %v2023
    %2111 = vmatprep.mubr.bf16.mxu0 %v1790
    %2112 = vmatmul.mubr.bf16.gmra.mxu0 %v1789
    %v2113 = vpop.f32.mrf.mxu0
    %v2114 = vadd.f32 %v1886, %v2113
    %v2115 = vpop.f32.mrf.mxu0
    %v2116 = vpop.f32.mrf.mxu0
    %v2117 = vadd.f32 %v1886, %v2116
    %v2118 = vpop.f32.mrf.mxu0
    %2119 = vmatprep.mubr.bf16.mxu0 %v1794
    %2120 = vmatmul.mubr.bf16.gmra.mxu0 %v1793
    %v2121 = vpop.f32.mrf.mxu0
    %v2122 = vadd.f32 %v1886, %v2121
    %v2123 = vpop.f32.mrf.mxu0
    %v2124 = vpop.f32.mrf.mxu0
    %v2125 = vadd.f32 %v1886, %v2124
    %v2126 = vpop.f32.mrf.mxu0
    %2127 = vmatprep.mubr.bf16.mxu0 %v1798
    %2128 = vmatmul.mubr.bf16.gmra.mxu0 %v1797
    %v2129 = vpop.f32.mrf.mxu0
    %v2130 = vadd.f32 %v1886, %v2129
    %v2131 = vpop.f32.mrf.mxu0
    %v2132 = vpop.f32.mrf.mxu0
    %v2133 = vadd.f32 %v1886, %v2132
    %v2134 = vpop.f32.mrf.mxu0
    %2135 = vmatprep.mubr.bf16.mxu0 %v1802
    %2136 = vmatmul.mubr.bf16.gmra.mxu0 %v1801
    %v2137 = vpop.f32.mrf.mxu0
    %v2138 = vadd.f32 %v1886, %v2137
    %v2139 = vpop.f32.mrf.mxu0
    %v2140 = vpop.f32.mrf.mxu0
    %v2141 = vadd.f32 %v1886, %v2140
    %v2142 = vpop.f32.mrf.mxu0
    %2143 = vmatprep.mubr.bf16.mxu0 %v1806
    %2144 = vmatmul.mubr.bf16.gmra.mxu0 %v1805
    %v2145 = vpop.f32.mrf.mxu0
    %v2146 = vadd.f32 %v1886, %v2145
    %v2147 = vpop.f32.mrf.mxu0
    %v2148 = vpop.f32.mrf.mxu0
    %v2149 = vadd.f32 %v1886, %v2148
    %v2150 = vpop.f32.mrf.mxu0
    %2151 = vmatprep.mubr.bf16.mxu0 %v1810
    %2152 = vmatmul.mubr.bf16.gmra.mxu0 %v1809
    %v2153 = vpop.f32.mrf.mxu0
    %v2154 = vadd.f32 %v1886, %v2153
    %v2155 = vpop.f32.mrf.mxu0
    %v2156 = vpop.f32.mrf.mxu0
    %v2157 = vadd.f32 %v1886, %v2156
    %v2158 = vpop.f32.mrf.mxu0
    %2159 = vmatprep.mubr.bf16.mxu0 %v1814
    %2160 = vmatmul.mubr.bf16.gmra.mxu0 %v1813
    %v2161 = vpop.f32.mrf.mxu0
    %v2162 = vadd.f32 %v1886, %v2161
    %v2163 = vpop.f32.mrf.mxu0
    %v2164 = vpop.f32.mrf.mxu0
    %v2165 = vadd.f32 %v1886, %v2164
    %v2166 = vpop.f32.mrf.mxu0
    %2167 = vmatprep.mubr.bf16.mxu0 %v1818
    %2168 = vmatmul.mubr.bf16.gmra.mxu0 %v1817
    %v2169 = vpop.f32.mrf.mxu0
    %v2170 = vadd.f32 %v1886, %v2169
    %v2171 = vpop.f32.mrf.mxu0
    %v2172 = vpop.f32.mrf.mxu0
    %v2173 = vadd.f32 %v1886, %v2172
    %v2174 = vpop.f32.mrf.mxu0
    %2175 = vdwg.mxu0
    %2176 = vmatprep.subr.bf16.mxu0 0
    %2177 = vmatpush1.bf16.msra.mxu0 %v2038
    %2178 = vmatprep.subr.bf16.mxu0 0
    %2179 = vmatpush1.bf16.msra.mxu0 %v2037
    %2180 = vmatprep.subr.bf16.mxu0 0
    %2181 = vmatpush1.bf16.msra.mxu0 %v2036
    %2182 = vmatprep.subr.bf16.mxu0 0
    %2183 = vmatpush1.bf16.msra.mxu0 %v2035
    %2184 = vmatprep.subr.bf16.mxu0 0
    %2185 = vmatpush1.bf16.msra.mxu0 %v2034
    %2186 = vmatprep.subr.bf16.mxu0 0
    %2187 = vmatpush1.bf16.msra.mxu0 %v2033
    %2188 = vmatprep.subr.bf16.mxu0 0
    %2189 = vmatpush1.bf16.msra.mxu0 %v2032
    %2190 = vmatprep.subr.bf16.mxu0 0
    %2191 = vmatpush1.bf16.msra.mxu0 %v2031
    %2192 = vmatprep.subr.bf16.mxu0 0
    %2193 = vmatpush2.bf16.msra.mxu0 %v2046
    %2194 = vmatprep.subr.bf16.mxu0 0
    %2195 = vmatpush2.bf16.msra.mxu0 %v2045
    %2196 = vmatprep.subr.bf16.mxu0 0
    %2197 = vmatpush2.bf16.msra.mxu0 %v2044
    %2198 = vmatprep.subr.bf16.mxu0 0
    %2199 = vmatpush2.bf16.msra.mxu0 %v2043
    %2200 = vmatprep.subr.bf16.mxu0 0
    %2201 = vmatpush2.bf16.msra.mxu0 %v2042
    %2202 = vmatprep.subr.bf16.mxu0 0
    %2203 = vmatpush2.bf16.msra.mxu0 %v2041
    %2204 = vmatprep.subr.bf16.mxu0 0
    %2205 = vmatpush2.bf16.msra.mxu0 %v2040
    %2206 = vmatprep.subr.bf16.mxu0 0
    %2207 = vmatpush2.bf16.msra.mxu0 %v2039
    %2208 = vmatprep.mubr.bf16.mxu0 %v1792
    %2209 = vmatmul.mubr.bf16.gmra.mxu0 %v1791
    %v2210 = vpop.f32.mrf.mxu0
    %v2211 = vadd.f32 %v2114, %v2210
    %v2212 = vpop.f32.mrf.mxu0
    %v2213 = vpop.f32.mrf.mxu0
    %v2214 = vadd.f32 %v2117, %v2213
    %v2215 = vpop.f32.mrf.mxu0
    %2216 = vmatprep.mubr.bf16.mxu0 %v1796
    %2217 = vmatmul.mubr.bf16.gmra.mxu0 %v1795
    %v2218 = vpop.f32.mrf.mxu0
    %v2219 = vadd.f32 %v2122, %v2218
    %v2220 = vpop.f32.mrf.mxu0
    %v2221 = vpop.f32.mrf.mxu0
    %v2222 = vadd.f32 %v2125, %v2221
    %v2223 = vpop.f32.mrf.mxu0
    %2224 = vmatprep.mubr.bf16.mxu0 %v1800
    %2225 = vmatmul.mubr.bf16.gmra.mxu0 %v1799
    %v2226 = vpop.f32.mrf.mxu0
    %v2227 = vadd.f32 %v2130, %v2226
    %v2228 = vpop.f32.mrf.mxu0
    %v2229 = vpop.f32.mrf.mxu0
    %v2230 = vadd.f32 %v2133, %v2229
    %v2231 = vpop.f32.mrf.mxu0
    %2232 = vmatprep.mubr.bf16.mxu0 %v1804
    %2233 = vmatmul.mubr.bf16.gmra.mxu0 %v1803
    %v2234 = vpop.f32.mrf.mxu0
    %v2235 = vadd.f32 %v2138, %v2234
    %v2236 = vpop.f32.mrf.mxu0
    %v2237 = vpop.f32.mrf.mxu0
    %v2238 = vadd.f32 %v2141, %v2237
    %v2239 = vpop.f32.mrf.mxu0
    %2240 = vmatprep.mubr.bf16.mxu0 %v1808
    %2241 = vmatmul.mubr.bf16.gmra.mxu0 %v1807
    %v2242 = vpop.f32.mrf.mxu0
    %v2243 = vadd.f32 %v2146, %v2242
    %v2244 = vpop.f32.mrf.mxu0
    %v2245 = vpop.f32.mrf.mxu0
    %v2246 = vadd.f32 %v2149, %v2245
    %v2247 = vpop.f32.mrf.mxu0
    %2248 = vmatprep.mubr.bf16.mxu0 %v1812
    %2249 = vmatmul.mubr.bf16.gmra.mxu0 %v1811
    %v2250 = vpop.f32.mrf.mxu0
    %v2251 = vadd.f32 %v2154, %v2250
    %v2252 = vpop.f32.mrf.mxu0
    %v2253 = vpop.f32.mrf.mxu0
    %v2254 = vadd.f32 %v2157, %v2253
    %v2255 = vpop.f32.mrf.mxu0
    %2256 = vmatprep.mubr.bf16.mxu0 %v1816
    %2257 = vmatmul.mubr.bf16.gmra.mxu0 %v1815
    %v2258 = vpop.f32.mrf.mxu0
    %v2259 = vadd.f32 %v2162, %v2258
    %v2260 = vpop.f32.mrf.mxu0
    %v2261 = vpop.f32.mrf.mxu0
    %v2262 = vadd.f32 %v2165, %v2261
    %v2263 = vpop.f32.mrf.mxu0
    %2264 = vmatprep.mubr.bf16.mxu0 %v1820
    %2265 = vmatmul.mubr.bf16.gmra.mxu0 %v1819
    %v2266 = vpop.f32.mrf.mxu0
    %v2267 = vadd.f32 %v2170, %v2266
    %v2268 = vpop.f32.mrf.mxu0
    %v2269 = vpop.f32.mrf.mxu0
    %v2270 = vadd.f32 %v2173, %v2269
    %v2271 = vpop.f32.mrf.mxu0
    %2272 = vdwg.mxu0
    %vm2273 = vcmask 7168
    %2274 = vst.msk [vmem:[%s7] sm:$0xff] %vm2273, %v2211
    %2275 = vst.msk [vmem:[%s7 + $0x8] sm:$0xff] %vm2273, %v2214
    %2276 = vst.msk [vmem:[%s7 + $0x10] sm:$0xff] %vm2273, %v2219
    %2277 = vst.msk [vmem:[%s7 + $0x18] sm:$0xff] %vm2273, %v2222
    %2278 = vst.msk [vmem:[%s7 + $0x20] sm:$0xff] %vm2273, %v2227
    %2279 = vst.msk [vmem:[%s7 + $0x28] sm:$0xff] %vm2273, %v2230
    %2280 = vst.msk [vmem:[%s7 + $0x30] sm:$0xff] %vm2273, %v2235
    %2281 = vst.msk [vmem:[%s7 + $0x38] sm:$0xff] %vm2273, %v2238
    %2282 = vst.msk [vmem:[%s7 + $0x40] sm:$0xff] %vm2273, %v2243
    %2283 = vst.msk [vmem:[%s7 + $0x48] sm:$0xff] %vm2273, %v2246
    %2284 = vst.msk [vmem:[%s7 + $0x50] sm:$0xff] %vm2273, %v2251
    %2285 = vst.msk [vmem:[%s7 + $0x58] sm:$0xff] %vm2273, %v2254
    %2286 = vst.msk [vmem:[%s7 + $0x60] sm:$0xff] %vm2273, %v2259
    %2287 = vst.msk [vmem:[%s7 + $0x68] sm:$0xff] %vm2273, %v2262
    %2288 = vst.msk [vmem:[%s7 + $0x70] sm:$0xff] %vm2273, %v2267
    %2289 = vst.msk [vmem:[%s7 + $0x78] sm:$0xff] %vm2273, %v2270
    // Predicated region
    $region34: #{tpu_custom_call.1} parent=1 // pred_check
      _
    $region35: #{tpu_custom_call.1} parent=1 // pred_check_branch
      %2291 = sbr.rel (0) target = $region37
    $region36: #{tpu_custom_call.1} parent=1 // pred_region
      _
    $region37: #{tpu_custom_call.1} parent=1 // pred_fallthru
      _
    // Predicated region
    $region38: #{tpu_custom_call.1} parent=1 // pred_check
      _
    $region39: #{tpu_custom_call.1} parent=1 // pred_check_branch
      %2293 = sbr.rel (0) target = $region41
    $region40: #{tpu_custom_call.1} parent=1 // pred_region
      _
    $region41: #{tpu_custom_call.1} parent=1 // pred_fallthru
      _
    %2294 = vsyncpa [#allocation4], 1

</llo_original>
